<compile_context>
chip_gen: v5e
topology: v5e:2x2
jax: 0.10.0
libtpu: 0.0.40
codegen_flags: <defaults>
</compile_context>

<pallas_src>
import functools

import jax
import jax.numpy as jnp
from jax.experimental import pallas as pl
from jax.experimental.pallas import tpu as pltpu

_LANE = 128


# ----------------------------------------------------------------------------
# Pallas kernels
# ----------------------------------------------------------------------------
def _patch_embed_norm_kernel(x_ref, g_ref, b_ref, o_ref, *, eps):
    """x_ref: (1, C, T) channel-first tile -> o_ref: (1, T, C) normalized, channel-last.

    LayerNorm stats (f32, eps matching nn.LayerNorm) and the affine are applied
    in the (C, T) layout (sublane-axis reductions -> VPU-heavy, XLU-light); the
    transpose is the last op and runs on the already-normalized, already-downcast
    tile.
    """
    xf = x_ref[0].astype(jnp.float32)                    # (C, T)
    mean = jnp.mean(xf, axis=0, keepdims=True)           # (1, T)  sublane reduce
    cent = xf - mean
    var = jnp.mean(cent * cent, axis=0, keepdims=True)   # (1, T)
    inv = jax.lax.rsqrt(var + eps)                       # (1, T)
    g = g_ref[...].astype(jnp.float32)                   # (C, 1) column
    b = b_ref[...].astype(jnp.float32)                   # (C, 1) column
    xn = cent * inv * g + b                              # still channel-first
    # Cast first (halves vregs to transpose for bf16 outputs), transpose last.
    o_ref[0] = xn.astype(o_ref.dtype).T


def _patch_embed_kernel(x_ref, o_ref):
    """norm_layer=None path: pure flatten+transpose, fused/tiled in VMEM.

    Transpose happens in the input's native dtype.
    """
    o_ref[0] = x_ref[0].T.astype(o_ref.dtype)


# ----------------------------------------------------------------------------
# Tiling helpers
# ----------------------------------------------------------------------------
def _round_up(x, m):
    return (x + m - 1) // m * m


def _pick_token_tile(hw, c, itemsize, batch, slab_budget_bytes=16 << 20):
    """VMEM-budgeted, 128-aligned token tile; keeps >=2 grid programs when possible."""
    per_token = max(1, 4 * c * itemsize)        # (in + out) x double buffer
    cap = max(_LANE, slab_budget_bytes // per_token // _LANE * _LANE)
    if cap >= hw:
        tile = hw                               # one tile covers the full token axis
    else:
        tile = cap                              # multiple of 128; last tile masked
    # Megacore (v7x has 2 TCs): make sure a parallel axis has >= 2 programs.
    if batch * pl.cdiv(hw, tile) < 2 and hw >= 2 * _LANE:
        tile = _round_up(pl.cdiv(hw, 2), _LANE)
    return tile


# ----------------------------------------------------------------------------
# Wrapper
# ----------------------------------------------------------------------------
def patch_embed_forward(x, gamma=None, beta=None, *, eps=1e-5, tile_hw=None,
                        slab_budget_bytes=16 << 20):
    """PatchEmbed.forward: (B, C, H, W) -> (B, H*W, C), optional LayerNorm over C."""
    B, C, H, W = x.shape
    HW = H * W
    x3 = x.reshape(B, C, HW)                    # contiguous view; transpose is in-kernel

    itemsize = jnp.dtype(x.dtype).itemsize
    if tile_hw is None:
        tile_hw = _pick_token_tile(HW, C, itemsize, B, slab_budget_bytes)
    if tile_hw != HW and tile_hw % _LANE != 0:
        raise ValueError("tile_hw must equal H*W or be a multiple of 128")

    n_tok_tiles = pl.cdiv(HW, tile_hw)          # partial last tile is masked
    grid = (B, n_tok_tiles)

    in_specs = [pl.BlockSpec((1, C, tile_hw), lambda b, i: (b, 0, i))]
    out_spec = pl.BlockSpec((1, tile_hw, C), lambda b, i: (b, i, 0))
    out_shape = jax.ShapeDtypeStruct((B, HW, C), x.dtype)

    if gamma is not None:
        kernel = functools.partial(_patch_embed_norm_kernel, eps=eps)
        in_specs += [
            pl.BlockSpec((C, 1), lambda b, i: (0, 0)),   # gamma, grid-invariant column
            pl.BlockSpec((C, 1), lambda b, i: (0, 0)),   # beta,  grid-invariant column
        ]
        args = (x3, gamma.reshape(C, 1), beta.reshape(C, 1))
        flops = 8 * B * HW * C
        transcendentals = B * HW                         # one rsqrt per token
        bytes_accessed = 2 * B * HW * C * itemsize + 2 * C * 4
    else:
        kernel = _patch_embed_kernel
        args = (x3,)
        flops = 0
        transcendentals = 0
        bytes_accessed = 2 * B * HW * C * itemsize

    return pl.pallas_call(
        kernel,
        grid=grid,
        in_specs=in_specs,
        out_specs=out_spec,
        out_shape=out_shape,
        compiler_params=pltpu.CompilerParams(
            dimension_semantics=("parallel", "parallel"),
            vmem_limit_bytes=32 * 1024 * 1024),
        cost_estimate=pl.CostEstimate(
            flops=flops, transcendentals=transcendentals,
            bytes_accessed=bytes_accessed),
    )(*args)


# ----------------------------------------------------------------------------
if __name__ == "__main__":
    # Config consistent with the module: img_size=128, patch_size=4 ->
    # patches_resolution (32, 32), embed_dim=96.  PatchEmbed.forward receives
    # the already-embedded feature map (B, embed_dim, H, W).
    B = 2
    embed_dim = 96
    H = W = 32
    L = H * W

    key = jax.random.PRNGKey(0)
    kx, kg, kb = jax.random.split(key, 3)
    x = jax.random.normal(kx, (B, embed_dim, H, W), jnp.float32)
    gamma = 1.0 + 0.02 * jax.random.normal(kg, (embed_dim,), jnp.float32)
    beta = 0.02 * jax.random.normal(kb, (embed_dim,), jnp.float32)

    def ref_forward(x, gamma=None, beta=None, eps=1e-5):
        b, c, h, w = x.shape
        xr = x.reshape(b, c, h * w).transpose(0, 2, 1)            # (B, L, C)
        if gamma is None:
            return xr
        mean = xr.mean(-1, keepdims=True)
        var = ((xr - mean) ** 2).mean(-1, keepdims=True)
        return (xr - mean) / jnp.sqrt(var + eps) * gamma + beta

    fwd = jax.jit(patch_embed_forward)

    # 1) norm_layer = nn.LayerNorm path.
    out = fwd(x, gamma, beta)
    jax.block_until_ready(out)
    ref = ref_forward(x, gamma, beta)
    assert out.shape == (B, L, embed_dim)
    assert bool(jnp.all(jnp.isfinite(out)))
    assert bool(jnp.allclose(out, ref, atol=1e-4, rtol=1e-4))

    # 2) norm_layer = None path (pure flatten + transpose).
    out2 = fwd(x)
    jax.block_until_ready(out2)
    assert out2.shape == (B, L, embed_dim)
    assert bool(jnp.allclose(out2, ref_forward(x), atol=1e-6, rtol=1e-6))

    # 3) HW not a multiple of 128 with a forced small tile -> exercises the
    #    cdiv grid with a masked partial last token tile.
    H2 = W2 = 18                                                  # HW = 324
    x_odd = jax.random.normal(kx, (B, embed_dim, H2, W2), jnp.float32)
    fwd_odd = jax.jit(functools.partial(patch_embed_forward, tile_hw=128))
    out3 = fwd_odd(x_odd, gamma, beta)
    jax.block_until_ready(out3)
    ref3 = ref_forward(x_odd, gamma, beta)
    assert out3.shape == (B, H2 * W2, embed_dim)
    assert bool(jnp.all(jnp.isfinite(out3)))
    assert bool(jnp.allclose(out3, ref3, atol=1e-4, rtol=1e-4))

    print("KERNEL_OK")
</pallas_src>

<mosaic_0001>
module attributes {stable_mosaic.version = 11 : i64} {
  func.func @_patch_embed_norm_kernel(%arg0: i32, %arg1: i32, %arg2: memref<1x96x1024xf32, #tpu.memory_space<vmem>>, %arg3: memref<96x1xf32, #tpu.memory_space<vmem>>, %arg4: memref<96x1xf32, #tpu.memory_space<vmem>>, %arg5: memref<1x1024x96xf32, #tpu.memory_space<vmem>>) attributes {dimension_semantics = [#tpu.dimension_semantics<parallel>, #tpu.dimension_semantics<parallel>], iteration_bounds = array<i64: 2, 1>, scalar_prefetch = 0 : i64, scratch_operands = 0 : i64, tpu.core_type = #tpu.core_type<tc>, window_params = [{transform_indices = @transform_0, window_bounds = array<i64: 1, 96, 1024>}, {pipeline_mode = #tpu.pipeline_mode<synchronous>, transform_indices = @transform_1, window_bounds = array<i64: 96, 1>}, {pipeline_mode = #tpu.pipeline_mode<synchronous>, transform_indices = @transform_2, window_bounds = array<i64: 96, 1>}, {transform_indices = @transform_3, window_bounds = array<i64: 1, 1024, 96>}]} {
    %c0 = arith.constant 0 : index
    %c0_0 = arith.constant 0 : index
    %c0_1 = arith.constant 0 : index
    %0 = vector.load %arg2[%c0, %c0_0, %c0_1] : memref<1x96x1024xf32, #tpu.memory_space<vmem>>, vector<1x96x1024xf32>
    %1 = vector.shape_cast %0 : vector<1x96x1024xf32> to vector<96x1024xf32>
    %cst = arith.constant dense<0.000000e+00> : vector<1024xf32>
    %2 = vector.multi_reduction <add>, %1, %cst [0] : vector<96x1024xf32> to vector<1024xf32>
    %3 = vector.shape_cast %2 : vector<1024xf32> to vector<1x1024xf32>
    %cst_2 = arith.constant 9.600000e+01 : f32
    %4 = vector.broadcast %cst_2 : f32 to vector<1x1024xf32>
    %5 = arith.divf %3, %4 : vector<1x1024xf32>
    %6 = vector.broadcast %5 : vector<1x1024xf32> to vector<96x1024xf32>
    %7 = arith.subf %1, %6 : vector<96x1024xf32>
    %8 = arith.mulf %7, %7 : vector<96x1024xf32>
    %cst_3 = arith.constant dense<0.000000e+00> : vector<1024xf32>
    %9 = vector.multi_reduction <add>, %8, %cst_3 [0] : vector<96x1024xf32> to vector<1024xf32>
    %10 = vector.shape_cast %9 : vector<1024xf32> to vector<1x1024xf32>
    %cst_4 = arith.constant 9.600000e+01 : f32
    %11 = vector.broadcast %cst_4 : f32 to vector<1x1024xf32>
    %12 = arith.divf %10, %11 : vector<1x1024xf32>
    %cst_5 = arith.constant 9.99999974E-6 : f32
    %13 = vector.broadcast %cst_5 : f32 to vector<1x1024xf32>
    %14 = arith.addf %12, %13 : vector<1x1024xf32>
    %15 = math.rsqrt %14 : vector<1x1024xf32>
    %c0_6 = arith.constant 0 : index
    %c0_7 = arith.constant 0 : index
    %16 = vector.load %arg3[%c0_6, %c0_7] : memref<96x1xf32, #tpu.memory_space<vmem>>, vector<96x1xf32>
    %c0_8 = arith.constant 0 : index
    %c0_9 = arith.constant 0 : index
    %17 = vector.load %arg4[%c0_8, %c0_9] : memref<96x1xf32, #tpu.memory_space<vmem>>, vector<96x1xf32>
    %18 = vector.broadcast %15 : vector<1x1024xf32> to vector<96x1024xf32>
    %19 = arith.mulf %7, %18 : vector<96x1024xf32>
    %20 = vector.broadcast %16 : vector<96x1xf32> to vector<96x1024xf32>
    %21 = arith.mulf %19, %20 : vector<96x1024xf32>
    %22 = vector.broadcast %17 : vector<96x1xf32> to vector<96x1024xf32>
    %23 = arith.addf %21, %22 : vector<96x1024xf32>
    %24 = tpu.transpose %23, [1, 0] : vector<96x1024xf32> -> vector<1024x96xf32>
    %c0_10 = arith.constant 0 : index
    %c0_11 = arith.constant 0 : index
    %c0_12 = arith.constant 0 : index
    %25 = vector.load %arg5[%c0_10, %c0_11, %c0_12] : memref<1x1024x96xf32, #tpu.memory_space<vmem>>, vector<1x1024x96xf32>
    %26 = vector.shape_cast %25 : vector<1x1024x96xf32> to vector<1024x96xf32>
    %27 = vector.shape_cast %24 : vector<1024x96xf32> to vector<1x1024x96xf32>
    tpu.vector_store %arg5[%c0_10, %c0_11, %c0_12], %27 {strides = array<i32>} : memref<1x1024x96xf32, #tpu.memory_space<vmem>>, vector<1x1024x96xf32>,
    return
  }
  func.func @transform_0(%arg0: i32, %arg1: i32) -> (i32, i32, i32) {
    %c0_i32 = arith.constant 0 : i32
    %c0_i32_0 = arith.constant 0 : i32
    return %arg0, %c0_i32, %arg1 : i32, i32, i32
  }
  func.func @transform_1(%arg0: i32, %arg1: i32) -> (i32, i32) {
    %c0_i32 = arith.constant 0 : i32
    %c0_i32_0 = arith.constant 0 : i32
    %c0_i32_1 = arith.constant 0 : i32
    return %c0_i32, %c0_i32_0 : i32, i32
  }
  func.func @transform_2(%arg0: i32, %arg1: i32) -> (i32, i32) {
    %c0_i32 = arith.constant 0 : i32
    %c0_i32_0 = arith.constant 0 : i32
    %c0_i32_1 = arith.constant 0 : i32
    return %c0_i32, %c0_i32_0 : i32, i32
  }
  func.func @transform_3(%arg0: i32, %arg1: i32) -> (i32, i32, i32) {
    %c0_i32 = arith.constant 0 : i32
    %c0_i32_0 = arith.constant 0 : i32
    return %arg0, %arg1, %c0_i32 : i32, i32, i32
  }
}

</mosaic_0001>

<llo_original>
// kernel: patch_embed_forward.1
$region0: #{patch_embed_forward.1}
  #allocation0 [shape = 'u32[]', space=smem, size = 0x4, offset = 0x4, fixed_abs, tag = 'smem constant byte address 0x4 - core index']
  #allocation1 [shape = 'u32[72,128]{1,0:T(1,128)}', space=vmem, size = 0x9000, scoped, tag = 'internal scratch']
  %s0 = inlined_call_operand.vmem [shape: f32[2,96,1024], index: 0, kind: input, shape index: {}]
  %s1 = inlined_call_operand.vmem [shape: f32[96,1], index: 1, kind: input, shape index: {}]
  %s2 = inlined_call_operand.vmem [shape: f32[96,1], index: 2, kind: input, shape index: {}]
  %s3 = inlined_call_operand.vmem [shape: f32[2,1024,96], index: 3, kind: output, shape index: {}]
  %s4 = sld [smem:[#allocation0]]
  $region45: #{patch_embed_forward.1} parent=0
    _
  %s6 = ssub.s32 1, %s4
  %s7 = scalar_select 0, %s6, %s4
  loop: start=0, step=1, limit=4
  $region2: #{patch_embed_forward.1} parent=0 // loop_pre_header
    _
  $region3: #{patch_embed_forward.1} parent=0 // loop_header
    %s9 = sphi 0, %s13
    %p10 = scmp.ge.s32.totalorder %s9, 4
    %s16 = sphi 0, %s28
    %s17 = sphi 0, %s24
    %s18 = sphi 0, %s16
    %s19 = sphi 0, %s17
    %s20 = sphi 0, %s18
    %s21 = sphi 0, %s19
    %s33 = sphi 0, %s35
    %s36 = sphi 0, %s33
    %s37 = sphi 0, %s36
    %s53 = sphi 0, %s37
    %s57 = sphi 0, %s57
    %s59 = sphi 0, %s57
    %s60 = sphi 0, %s59
    %s74 = sphi 0, %s60
    %s78 = sphi 0, %s78
    %s80 = sphi 0, %s78
    %s81 = sphi 0, %s80
    %s95 = sphi 0, %s81
    %s103 = sphi 0, %s105
    %s106 = sphi 0, %s103
    %s107 = sphi 0, %s106
    %s123 = sphi 0, %s107
  $region4: #{patch_embed_forward.1} parent=0 // loop_header_branch
    %12 = sbr.rel (%p10) target = $region8
  $region5: #{patch_embed_forward.1} parent=0 // loop_body
    %s14 = ssub.s32 %s9, 1
    %s15 = ssub.s32 %s9, 2
    %s22 = sadd.s32 1, %s17
    %p23 = scmp.ge.s32.totalorder %s22, 1
    %s24 = scalar_select %p23, 0, %s22
    %s25 = sadd.s32 1, %s16
    %s26 = scalar_select %p23, %s25, %s16
    %p27 = scmp.ge.s32.totalorder %s26, 2
    %s28 = scalar_select %p27, 0, %s26
    %s29 = ssub.s32 %s16, %s28
    %s30 = ssub.s32 %s17, %s24
    %s31 = sor.u32 %s29, %s30
    %p32 = scmp.eq.s32.totalorder %s31, 0
    %s34 = sadd.s32 %s33, 1
    %s35 = scalar_select %p32, %s33, %s34
    %p38 = pneg %p32
    %p39 = scmp.eq.s32.totalorder %s9, 1
    %p40 = por %p38, %p39
    %p41 = scmp.ne.s32.totalorder %s33, %s36
    %p42 = scmp.eq.s32.totalorder %s9, 0
    %p43 = por %p41, %p42
    %p44 = scmp.ne.s32.totalorder %s33, %s36
    %p45 = scmp.eq.s32.totalorder %s14, 1
    %p46 = por %p44, %p45
    %p47 = scmp.ne.s32.totalorder %s36, %s37
    %p48 = scmp.eq.s32.totalorder %s14, 0
    %p49 = por %p47, %p48
    %p50 = scmp.ne.s32.totalorder %s36, %s37
    %p51 = scmp.eq.s32.totalorder %s15, 1
    %p52 = por %p50, %p51
    %p54 = scmp.ne.s32.totalorder %s37, %s53
    %p55 = scmp.eq.s32.totalorder %s15, 0
    %p56 = por %p54, %p55
    %s58 = sadd.s32 %s57, 1
    %p61 = scmp.eq.s32.totalorder %s9, 1
    %p62 = scmp.ne.s32.totalorder %s57, %s59
    %p63 = scmp.eq.s32.totalorder %s9, 0
    %p64 = por %p62, %p63
    %p65 = scmp.ne.s32.totalorder %s57, %s59
    %p66 = scmp.eq.s32.totalorder %s14, 1
    %p67 = por %p65, %p66
    %p68 = scmp.ne.s32.totalorder %s59, %s60
    %p69 = scmp.eq.s32.totalorder %s14, 0
    %p70 = por %p68, %p69
    %p71 = scmp.ne.s32.totalorder %s59, %s60
    %p72 = scmp.eq.s32.totalorder %s15, 1
    %p73 = por %p71, %p72
    %p75 = scmp.ne.s32.totalorder %s60, %s74
    %p76 = scmp.eq.s32.totalorder %s15, 0
    %p77 = por %p75, %p76
    %s79 = sadd.s32 %s78, 1
    %p82 = scmp.eq.s32.totalorder %s9, 1
    %p83 = scmp.ne.s32.totalorder %s78, %s80
    %p84 = scmp.eq.s32.totalorder %s9, 0
    %p85 = por %p83, %p84
    %p86 = scmp.ne.s32.totalorder %s78, %s80
    %p87 = scmp.eq.s32.totalorder %s14, 1
    %p88 = por %p86, %p87
    %p89 = scmp.ne.s32.totalorder %s80, %s81
    %p90 = scmp.eq.s32.totalorder %s14, 0
    %p91 = por %p89, %p90
    %p92 = scmp.ne.s32.totalorder %s80, %s81
    %p93 = scmp.eq.s32.totalorder %s15, 1
    %p94 = por %p92, %p93
    %p96 = scmp.ne.s32.totalorder %s81, %s95
    %p97 = scmp.eq.s32.totalorder %s15, 0
    %p98 = por %p96, %p97
    %s99 = ssub.s32 %s16, %s28
    %s100 = ssub.s32 %s17, %s24
    %s101 = sor.u32 %s99, %s100
    %p102 = scmp.eq.s32.totalorder %s101, 0
    %s104 = sadd.s32 %s103, 1
    %s105 = scalar_select %p102, %s103, %s104
    %p108 = pneg %p102
    %p109 = scmp.eq.s32.totalorder %s9, 1
    %p110 = por %p108, %p109
    %p111 = scmp.ne.s32.totalorder %s103, %s106
    %p112 = scmp.eq.s32.totalorder %s9, 0
    %p113 = por %p111, %p112
    %p114 = scmp.ne.s32.totalorder %s103, %s106
    %p115 = scmp.eq.s32.totalorder %s14, 1
    %p116 = por %p114, %p115
    %p117 = scmp.ne.s32.totalorder %s106, %s107
    %p118 = scmp.eq.s32.totalorder %s14, 0
    %p119 = por %p117, %p118
    %p120 = scmp.ne.s32.totalorder %s106, %s107
    %p121 = scmp.eq.s32.totalorder %s15, 1
    %p122 = por %p120, %p121
    %p124 = scmp.ne.s32.totalorder %s107, %s123
    %p125 = scmp.eq.s32.totalorder %s15, 0
    %p126 = por %p124, %p125
    %p127 = scmp.le.s32.totalorder 1, %s9
    %p128 = scmp.lt.s32.totalorder %s9, 3
    %p129 = pnand %p127, %p128
    %p130 = pneg %p129
    // Predicated region
    $region9: #{patch_embed_forward.1} parent=5 // pred_check
      _
    $region10: #{patch_embed_forward.1} parent=5 // pred_check_branch
      %132 = sbr.rel (%p129) target = $region12
    $region11: #{patch_embed_forward.1} parent=5 // pred_region
      %s133 = ssub.s32 %s9, 1
      // Predicated region
      $region13: #{patch_embed_forward.1} parent=11 // pred_check
        %p134 = pneg %p70
      $region14: #{patch_embed_forward.1} parent=11 // pred_check_branch
        %136 = sbr.rel (%p134) target = $region16
      $region15: #{patch_embed_forward.1} parent=11 // pred_region
        _
      $region16: #{patch_embed_forward.1} parent=11 // pred_fallthru
        _
      // Predicated region
      $region17: #{patch_embed_forward.1} parent=11 // pred_check
        %p137 = pneg %p91
      $region18: #{patch_embed_forward.1} parent=11 // pred_check_branch
        %139 = sbr.rel (%p137) target = $region20
      $region19: #{patch_embed_forward.1} parent=11 // pred_region
        _
      $region20: #{patch_embed_forward.1} parent=11 // pred_fallthru
        _
    $region12: #{patch_embed_forward.1} parent=5 // pred_fallthru
      _
    %p140 = scmp.lt.s32.totalorder %s9, 2
    // Predicated region
    $region21: #{patch_embed_forward.1} parent=5 // pred_check
      %p141 = pneg %p140
    $region22: #{patch_embed_forward.1} parent=5 // pred_check_branch
      %143 = sbr.rel (%p141) target = $region24
    $region23: #{patch_embed_forward.1} parent=5 // pred_region
      // Predicated region
      $region25: #{patch_embed_forward.1} parent=23 // pred_check
        %p144 = pneg %p43
      $region26: #{patch_embed_forward.1} parent=23 // pred_check_branch
        %146 = sbr.rel (%p144) target = $region28
      $region27: #{patch_embed_forward.1} parent=23 // pred_region
        %s147 = smul.u32 8, %s17
        %p148 = scmp.lt.s32.totalorder %s16, 1
        %s149 = scalar_select %p148, %s16, 1
        %p150 = scmp.lt.s32.totalorder %s147, 7
        %s151 = scalar_select %p150, %s147, 7
        %s152 = smul.addr %s149, 96
        %s153 = sadd.s32 %s151, %s152
        %s154 = smul.addr %s153, 8
        %s155 = scalar_lea.vmem %s0, %s154
        %s156 = smul.u32 8, %s17
      $region28: #{patch_embed_forward.1} parent=23 // pred_fallthru
        _
    $region24: #{patch_embed_forward.1} parent=5 // pred_fallthru
      _
    %p157 = scmp.le.s32.totalorder 1, %s9
    %p158 = scmp.lt.s32.totalorder %s9, 3
    %p159 = pnand %p157, %p158
    %p160 = pneg %p159
    // Predicated region
    $region29: #{patch_embed_forward.1} parent=5 // pred_check
      _
    $region30: #{patch_embed_forward.1} parent=5 // pred_check_branch
      %162 = sbr.rel (%p159) target = $region32
    $region31: #{patch_embed_forward.1} parent=5 // pred_region
      %s163 = ssub.s32 %s9, 1
      %s164 = smul.u32 8, %s19
      %p165 = scmp.lt.s32.totalorder %s18, 1
      %s166 = scalar_select %p165, %s18, 1
      %p167 = scmp.lt.s32.totalorder %s164, 7
      %s168 = scalar_select %p167, %s164, 7
      %s169 = smul.addr %s166, 96
      %s170 = sadd.s32 %s168, %s169
      %s171 = smul.addr %s170, 8
      %s172 = scalar_lea.vmem %s0, %s171
      %p173 = pneg %p49
      %p174 = pneg %p46
      %p175 = pneg %p70
      %p176 = pneg %p67
      %p177 = pneg %p91
      %p178 = pneg %p88
      %p179 = pneg %p119
      %p180 = pneg %p116
      %s181 = smul.u32 128, %s19
      %p182 = scmp.lt.s32.totalorder %s18, 1
      %s183 = scalar_select %p182, %s18, 1
      %p184 = scmp.lt.s32.totalorder %s181, 127
      %s185 = scalar_select %p184, %s181, 127
      %s186 = smul.addr %s183, 128
      %s187 = sadd.s32 %s185, %s186
      %s188 = smul.addr %s187, 8
      %s189 = scalar_lea.vmem %s3, %s188
      %s190 = smul.u32 8, %s19
      %p191 = scmp.lt.s32.totalorder %s18, 1
      %s192 = scalar_select %p191, %s18, 1
      %p193 = scmp.lt.s32.totalorder %s190, 7
      %s194 = scalar_select %p193, %s190, 7
      %s195 = smul.addr %s192, 96
      %s196 = sadd.s32 %s194, %s195
      %s197 = smul.addr %s196, 8
      %s198 = scalar_lea.vmem %s0, %s197
      %s199 = smul.u32 8, %s19
      %s200 = smul.u32 128, %s19
      %p201 = scmp.lt.s32.totalorder %s18, 1
      %s202 = scalar_select %p201, %s18, 1
      %p203 = scmp.lt.s32.totalorder %s200, 127
      %s204 = scalar_select %p203, %s200, 127
      %s205 = smul.addr %s202, 128
      %s206 = sadd.s32 %s204, %s205
      %s207 = smul.addr %s206, 8
      %s208 = scalar_lea.vmem %s3, %s207
      %s209 = smul.u32 128, %s19
      %v210 = vld [vmem:[%s198] sm:$0xff]
      %v211 = vld [vmem:[%s198 + $0x8] sm:$0xff]
      %v212 = vld [vmem:[%s198 + $0x10] sm:$0xff]
      %v213 = vld [vmem:[%s198 + $0x18] sm:$0xff]
      %v214 = vld [vmem:[%s198 + $0x20] sm:$0xff]
      %v215 = vld [vmem:[%s198 + $0x28] sm:$0xff]
      %v216 = vld [vmem:[%s198 + $0x30] sm:$0xff]
      %v217 = vld [vmem:[%s198 + $0x38] sm:$0xff]
      %v218 = vld [vmem:[%s198 + $0x40] sm:$0xff]
      %v219 = vld [vmem:[%s198 + $0x48] sm:$0xff]
      %v220 = vld [vmem:[%s198 + $0x50] sm:$0xff]
      %v221 = vld [vmem:[%s198 + $0x58] sm:$0xff]
      %v222 = vld [vmem:[%s198 + $0x60] sm:$0xff]
      %v223 = vld [vmem:[%s198 + $0x68] sm:$0xff]
      %v224 = vld [vmem:[%s198 + $0x70] sm:$0xff]
      %v225 = vld [vmem:[%s198 + $0x78] sm:$0xff]
      %v226 = vld [vmem:[%s198 + $0x80] sm:$0xff]
      %v227 = vld [vmem:[%s198 + $0x88] sm:$0xff]
      %v228 = vld [vmem:[%s198 + $0x90] sm:$0xff]
      %v229 = vld [vmem:[%s198 + $0x98] sm:$0xff]
      %v230 = vld [vmem:[%s198 + $0xa0] sm:$0xff]
      %v231 = vld [vmem:[%s198 + $0xa8] sm:$0xff]
      %v232 = vld [vmem:[%s198 + $0xb0] sm:$0xff]
      %v233 = vld [vmem:[%s198 + $0xb8] sm:$0xff]
      %v234 = vld [vmem:[%s198 + $0xc0] sm:$0xff]
      %v235 = vld [vmem:[%s198 + $0xc8] sm:$0xff]
      %v236 = vld [vmem:[%s198 + $0xd0] sm:$0xff]
      %v237 = vld [vmem:[%s198 + $0xd8] sm:$0xff]
      %v238 = vld [vmem:[%s198 + $0xe0] sm:$0xff]
      %v239 = vld [vmem:[%s198 + $0xe8] sm:$0xff]
      %v240 = vld [vmem:[%s198 + $0xf0] sm:$0xff]
      %v241 = vld [vmem:[%s198 + $0xf8] sm:$0xff]
      %v242 = vld [vmem:[%s198 + $0x100] sm:$0xff]
      %v243 = vld [vmem:[%s198 + $0x108] sm:$0xff]
      %v244 = vld [vmem:[%s198 + $0x110] sm:$0xff]
      %v245 = vld [vmem:[%s198 + $0x118] sm:$0xff]
      %v246 = vld [vmem:[%s198 + $0x120] sm:$0xff]
      %v247 = vld [vmem:[%s198 + $0x128] sm:$0xff]
      %v248 = vld [vmem:[%s198 + $0x130] sm:$0xff]
      %v249 = vld [vmem:[%s198 + $0x138] sm:$0xff]
      %v250 = vld [vmem:[%s198 + $0x140] sm:$0xff]
      %v251 = vld [vmem:[%s198 + $0x148] sm:$0xff]
      %v252 = vld [vmem:[%s198 + $0x150] sm:$0xff]
      %v253 = vld [vmem:[%s198 + $0x158] sm:$0xff]
      %v254 = vld [vmem:[%s198 + $0x160] sm:$0xff]
      %v255 = vld [vmem:[%s198 + $0x168] sm:$0xff]
      %v256 = vld [vmem:[%s198 + $0x170] sm:$0xff]
      %v257 = vld [vmem:[%s198 + $0x178] sm:$0xff]
      %v258 = vld [vmem:[%s198 + $0x180] sm:$0xff]
      %v259 = vld [vmem:[%s198 + $0x188] sm:$0xff]
      %v260 = vld [vmem:[%s198 + $0x190] sm:$0xff]
      %v261 = vld [vmem:[%s198 + $0x198] sm:$0xff]
      %v262 = vld [vmem:[%s198 + $0x1a0] sm:$0xff]
      %v263 = vld [vmem:[%s198 + $0x1a8] sm:$0xff]
      %v264 = vld [vmem:[%s198 + $0x1b0] sm:$0xff]
      %v265 = vld [vmem:[%s198 + $0x1b8] sm:$0xff]
      %v266 = vld [vmem:[%s198 + $0x1c0] sm:$0xff]
      %v267 = vld [vmem:[%s198 + $0x1c8] sm:$0xff]
      %v268 = vld [vmem:[%s198 + $0x1d0] sm:$0xff]
      %v269 = vld [vmem:[%s198 + $0x1d8] sm:$0xff]
      %v270 = vld [vmem:[%s198 + $0x1e0] sm:$0xff]
      %v271 = vld [vmem:[%s198 + $0x1e8] sm:$0xff]
      %v272 = vld [vmem:[%s198 + $0x1f0] sm:$0xff]
      %v273 = vld [vmem:[%s198 + $0x1f8] sm:$0xff]
      %v274 = vld [vmem:[%s198 + $0x200] sm:$0xff]
      %v275 = vld [vmem:[%s198 + $0x208] sm:$0xff]
      %v276 = vld [vmem:[%s198 + $0x210] sm:$0xff]
      %v277 = vld [vmem:[%s198 + $0x218] sm:$0xff]
      %v278 = vld [vmem:[%s198 + $0x220] sm:$0xff]
      %v279 = vld [vmem:[%s198 + $0x228] sm:$0xff]
      %v280 = vld [vmem:[%s198 + $0x230] sm:$0xff]
      %v281 = vld [vmem:[%s198 + $0x238] sm:$0xff]
      %v282 = vld [vmem:[%s198 + $0x240] sm:$0xff]
      %v283 = vld [vmem:[%s198 + $0x248] sm:$0xff]
      %v284 = vld [vmem:[%s198 + $0x250] sm:$0xff]
      %v285 = vld [vmem:[%s198 + $0x258] sm:$0xff]
      %v286 = vld [vmem:[%s198 + $0x260] sm:$0xff]
      %v287 = vld [vmem:[%s198 + $0x268] sm:$0xff]
      %v288 = vld [vmem:[%s198 + $0x270] sm:$0xff]
      %v289 = vld [vmem:[%s198 + $0x278] sm:$0xff]
      %v290 = vld [vmem:[%s198 + $0x280] sm:$0xff]
      %v291 = vld [vmem:[%s198 + $0x288] sm:$0xff]
      %v292 = vld [vmem:[%s198 + $0x290] sm:$0xff]
      %v293 = vld [vmem:[%s198 + $0x298] sm:$0xff]
      %v294 = vld [vmem:[%s198 + $0x2a0] sm:$0xff]
      %v295 = vld [vmem:[%s198 + $0x2a8] sm:$0xff]
      %v296 = vld [vmem:[%s198 + $0x2b0] sm:$0xff]
      %v297 = vld [vmem:[%s198 + $0x2b8] sm:$0xff]
      %v298 = vld [vmem:[%s198 + $0x2c0] sm:$0xff]
      %v299 = vld [vmem:[%s198 + $0x2c8] sm:$0xff]
      %v300 = vld [vmem:[%s198 + $0x2d0] sm:$0xff]
      %v301 = vld [vmem:[%s198 + $0x2d8] sm:$0xff]
      %v302 = vld [vmem:[%s198 + $0x2e0] sm:$0xff]
      %v303 = vld [vmem:[%s198 + $0x2e8] sm:$0xff]
      %v304 = vld [vmem:[%s198 + $0x2f0] sm:$0xff]
      %v305 = vld [vmem:[%s198 + $0x2f8] sm:$0xff]
      %v306 = vadd.f32 %v210, %v218
      %v307 = vadd.f32 %v306, %v226
      %v308 = vadd.f32 %v307, %v234
      %v309 = vadd.f32 %v308, %v242
      %v310 = vadd.f32 %v309, %v250
      %v311 = vadd.f32 %v310, %v258
      %v312 = vadd.f32 %v311, %v266
      %v313 = vadd.f32 %v312, %v274
      %v314 = vadd.f32 %v313, %v282
      %v315 = vadd.f32 %v314, %v290
      %v316 = vadd.f32 %v315, %v298
      %v317 = vrot.slane %v316, 4
      %v318 = vadd.f32 %v316, %v317
      %v319 = vrot.slane %v318, 2
      %v320 = vadd.f32 %v318, %v319
      %v321 = vrot.slane %v320, 1
      %v322 = vadd.f32 %v320, %v321
      %v323 = vadd.f32 %v211, %v219
      %v324 = vadd.f32 %v323, %v227
      %v325 = vadd.f32 %v324, %v235
      %v326 = vadd.f32 %v325, %v243
      %v327 = vadd.f32 %v326, %v251
      %v328 = vadd.f32 %v327, %v259
      %v329 = vadd.f32 %v328, %v267
      %v330 = vadd.f32 %v329, %v275
      %v331 = vadd.f32 %v330, %v283
      %v332 = vadd.f32 %v331, %v291
      %v333 = vadd.f32 %v332, %v299
      %v334 = vrot.slane %v333, 4
      %v335 = vadd.f32 %v333, %v334
      %v336 = vrot.slane %v335, 2
      %v337 = vadd.f32 %v335, %v336
      %v338 = vrot.slane %v337, 1
      %v339 = vadd.f32 %v337, %v338
      %v340 = vadd.f32 %v212, %v220
      %v341 = vadd.f32 %v340, %v228
      %v342 = vadd.f32 %v341, %v236
      %v343 = vadd.f32 %v342, %v244
      %v344 = vadd.f32 %v343, %v252
      %v345 = vadd.f32 %v344, %v260
      %v346 = vadd.f32 %v345, %v268
      %v347 = vadd.f32 %v346, %v276
      %v348 = vadd.f32 %v347, %v284
      %v349 = vadd.f32 %v348, %v292
      %v350 = vadd.f32 %v349, %v300
      %v351 = vrot.slane %v350, 4
      %v352 = vadd.f32 %v350, %v351
      %v353 = vrot.slane %v352, 2
      %v354 = vadd.f32 %v352, %v353
      %v355 = vrot.slane %v354, 1
      %v356 = vadd.f32 %v354, %v355
      %v357 = vadd.f32 %v213, %v221
      %v358 = vadd.f32 %v357, %v229
      %v359 = vadd.f32 %v358, %v237
      %v360 = vadd.f32 %v359, %v245
      %v361 = vadd.f32 %v360, %v253
      %v362 = vadd.f32 %v361, %v261
      %v363 = vadd.f32 %v362, %v269
      %v364 = vadd.f32 %v363, %v277
      %v365 = vadd.f32 %v364, %v285
      %v366 = vadd.f32 %v365, %v293
      %v367 = vadd.f32 %v366, %v301
      %v368 = vrot.slane %v367, 4
      %v369 = vadd.f32 %v367, %v368
      %v370 = vrot.slane %v369, 2
      %v371 = vadd.f32 %v369, %v370
      %v372 = vrot.slane %v371, 1
      %v373 = vadd.f32 %v371, %v372
      %v374 = vadd.f32 %v214, %v222
      %v375 = vadd.f32 %v374, %v230
      %v376 = vadd.f32 %v375, %v238
      %v377 = vadd.f32 %v376, %v246
      %v378 = vadd.f32 %v377, %v254
      %v379 = vadd.f32 %v378, %v262
      %v380 = vadd.f32 %v379, %v270
      %v381 = vadd.f32 %v380, %v278
      %v382 = vadd.f32 %v381, %v286
      %v383 = vadd.f32 %v382, %v294
      %v384 = vadd.f32 %v383, %v302
      %v385 = vrot.slane %v384, 4
      %v386 = vadd.f32 %v384, %v385
      %v387 = vrot.slane %v386, 2
      %v388 = vadd.f32 %v386, %v387
      %v389 = vrot.slane %v388, 1
      %v390 = vadd.f32 %v388, %v389
      %v391 = vadd.f32 %v215, %v223
      %v392 = vadd.f32 %v391, %v231
      %v393 = vadd.f32 %v392, %v239
      %v394 = vadd.f32 %v393, %v247
      %v395 = vadd.f32 %v394, %v255
      %v396 = vadd.f32 %v395, %v263
      %v397 = vadd.f32 %v396, %v271
      %v398 = vadd.f32 %v397, %v279
      %v399 = vadd.f32 %v398, %v287
      %v400 = vadd.f32 %v399, %v295
      %v401 = vadd.f32 %v400, %v303
      %v402 = vrot.slane %v401, 4
      %v403 = vadd.f32 %v401, %v402
      %v404 = vrot.slane %v403, 2
      %v405 = vadd.f32 %v403, %v404
      %v406 = vrot.slane %v405, 1
      %v407 = vadd.f32 %v405, %v406
      %v408 = vadd.f32 %v216, %v224
      %v409 = vadd.f32 %v408, %v232
      %v410 = vadd.f32 %v409, %v240
      %v411 = vadd.f32 %v410, %v248
      %v412 = vadd.f32 %v411, %v256
      %v413 = vadd.f32 %v412, %v264
      %v414 = vadd.f32 %v413, %v272
      %v415 = vadd.f32 %v414, %v280
      %v416 = vadd.f32 %v415, %v288
      %v417 = vadd.f32 %v416, %v296
      %v418 = vadd.f32 %v417, %v304
      %v419 = vrot.slane %v418, 4
      %v420 = vadd.f32 %v418, %v419
      %v421 = vrot.slane %v420, 2
      %v422 = vadd.f32 %v420, %v421
      %v423 = vrot.slane %v422, 1
      %v424 = vadd.f32 %v422, %v423
      %v425 = vadd.f32 %v217, %v225
      %v426 = vadd.f32 %v425, %v233
      %v427 = vadd.f32 %v426, %v241
      %v428 = vadd.f32 %v427, %v249
      %v429 = vadd.f32 %v428, %v257
      %v430 = vadd.f32 %v429, %v265
      %v431 = vadd.f32 %v430, %v273
      %v432 = vadd.f32 %v431, %v281
      %v433 = vadd.f32 %v432, %v289
      %v434 = vadd.f32 %v433, %v297
      %v435 = vadd.f32 %v434, %v305
      %v436 = vrot.slane %v435, 4
      %v437 = vadd.f32 %v435, %v436
      %v438 = vrot.slane %v437, 2
      %v439 = vadd.f32 %v437, %v438
      %v440 = vrot.slane %v439, 1
      %v441 = vadd.f32 %v439, %v440
      %v442 = vrcp.pop 96.0
      %v443 = vmul.f32 96.0, %v442
      %v444 = vsub.f32 1.0, %v443
      %v445 = vmul.f32 %v442, %v444
      %v446 = vadd.f32 %v442, %v445
      %vm447 = vweird.f32 %v442
      %v448 = vsel %vm447, %v442, %v446
      %v449 = vmul.f32 %v322, %v448
      %v450 = vmul.f32 %v339, %v448
      %v451 = vmul.f32 %v356, %v448
      %v452 = vmul.f32 %v373, %v448
      %v453 = vmul.f32 %v390, %v448
      %v454 = vmul.f32 %v407, %v448
      %v455 = vmul.f32 %v424, %v448
      %v456 = vmul.f32 %v441, %v448
      %v457 = vsub.f32 %v210, %v449
      %v458 = vsub.f32 %v211, %v450
      %v459 = vsub.f32 %v212, %v451
      %v460 = vsub.f32 %v213, %v452
      %v461 = vsub.f32 %v214, %v453
      %v462 = vsub.f32 %v215, %v454
      %v463 = vsub.f32 %v216, %v455
      %v464 = vsub.f32 %v217, %v456
      %v465 = vsub.f32 %v218, %v449
      %v466 = vsub.f32 %v219, %v450
      %v467 = vsub.f32 %v220, %v451
      %v468 = vsub.f32 %v221, %v452
      %v469 = vsub.f32 %v222, %v453
      %v470 = vsub.f32 %v223, %v454
      %v471 = vsub.f32 %v224, %v455
      %v472 = vsub.f32 %v225, %v456
      %v473 = vsub.f32 %v226, %v449
      %v474 = vsub.f32 %v227, %v450
      %v475 = vsub.f32 %v228, %v451
      %v476 = vsub.f32 %v229, %v452
      %v477 = vsub.f32 %v230, %v453
      %v478 = vsub.f32 %v231, %v454
      %v479 = vsub.f32 %v232, %v455
      %v480 = vsub.f32 %v233, %v456
      %v481 = vsub.f32 %v234, %v449
      %v482 = vsub.f32 %v235, %v450
      %v483 = vsub.f32 %v236, %v451
      %v484 = vsub.f32 %v237, %v452
      %v485 = vsub.f32 %v238, %v453
      %v486 = vsub.f32 %v239, %v454
      %v487 = vsub.f32 %v240, %v455
      %v488 = vsub.f32 %v241, %v456
      %v489 = vsub.f32 %v242, %v449
      %v490 = vsub.f32 %v243, %v450
      %v491 = vsub.f32 %v244, %v451
      %v492 = vsub.f32 %v245, %v452
      %v493 = vsub.f32 %v246, %v453
      %v494 = vsub.f32 %v247, %v454
      %v495 = vsub.f32 %v248, %v455
      %v496 = vsub.f32 %v249, %v456
      %v497 = vsub.f32 %v250, %v449
      %v498 = vsub.f32 %v251, %v450
      %v499 = vsub.f32 %v252, %v451
      %v500 = vsub.f32 %v253, %v452
      %v501 = vsub.f32 %v254, %v453
      %v502 = vsub.f32 %v255, %v454
      %v503 = vsub.f32 %v256, %v455
      %v504 = vsub.f32 %v257, %v456
      %v505 = vsub.f32 %v258, %v449
      %v506 = vsub.f32 %v259, %v450
      %v507 = vsub.f32 %v260, %v451
      %v508 = vsub.f32 %v261, %v452
      %v509 = vsub.f32 %v262, %v453
      %v510 = vsub.f32 %v263, %v454
      %v511 = vsub.f32 %v264, %v455
      %v512 = vsub.f32 %v265, %v456
      %v513 = vsub.f32 %v266, %v449
      %v514 = vsub.f32 %v267, %v450
      %v515 = vsub.f32 %v268, %v451
      %v516 = vsub.f32 %v269, %v452
      %v517 = vsub.f32 %v270, %v453
      %v518 = vsub.f32 %v271, %v454
      %v519 = vsub.f32 %v272, %v455
      %v520 = vsub.f32 %v273, %v456
      %v521 = vsub.f32 %v274, %v449
      %v522 = vsub.f32 %v275, %v450
      %v523 = vsub.f32 %v276, %v451
      %v524 = vsub.f32 %v277, %v452
      %v525 = vsub.f32 %v278, %v453
      %v526 = vsub.f32 %v279, %v454
      %v527 = vsub.f32 %v280, %v455
      %v528 = vsub.f32 %v281, %v456
      %v529 = vsub.f32 %v282, %v449
      %v530 = vsub.f32 %v283, %v450
      %v531 = vsub.f32 %v284, %v451
      %v532 = vsub.f32 %v285, %v452
      %v533 = vsub.f32 %v286, %v453
      %v534 = vsub.f32 %v287, %v454
      %v535 = vsub.f32 %v288, %v455
      %v536 = vsub.f32 %v289, %v456
      %v537 = vsub.f32 %v290, %v449
      %v538 = vsub.f32 %v291, %v450
      %v539 = vsub.f32 %v292, %v451
      %v540 = vsub.f32 %v293, %v452
      %v541 = vsub.f32 %v294, %v453
      %v542 = vsub.f32 %v295, %v454
      %v543 = vsub.f32 %v296, %v455
      %v544 = vsub.f32 %v297, %v456
      %v545 = vsub.f32 %v298, %v449
      %v546 = vsub.f32 %v299, %v450
      %v547 = vsub.f32 %v300, %v451
      %v548 = vsub.f32 %v301, %v452
      %v549 = vsub.f32 %v302, %v453
      %v550 = vsub.f32 %v303, %v454
      %v551 = vsub.f32 %v304, %v455
      %v552 = vsub.f32 %v305, %v456
      %v553 = vmul.f32 %v457, %v457
      %v554 = vmul.f32 %v458, %v458
      %v555 = vmul.f32 %v459, %v459
      %v556 = vmul.f32 %v460, %v460
      %v557 = vmul.f32 %v461, %v461
      %v558 = vmul.f32 %v462, %v462
      %v559 = vmul.f32 %v463, %v463
      %v560 = vmul.f32 %v464, %v464
      %v561 = vmul.f32 %v465, %v465
      %v562 = vmul.f32 %v466, %v466
      %v563 = vmul.f32 %v467, %v467
      %v564 = vmul.f32 %v468, %v468
      %v565 = vmul.f32 %v469, %v469
      %v566 = vmul.f32 %v470, %v470
      %v567 = vmul.f32 %v471, %v471
      %v568 = vmul.f32 %v472, %v472
      %v569 = vmul.f32 %v473, %v473
      %v570 = vmul.f32 %v474, %v474
      %v571 = vmul.f32 %v475, %v475
      %v572 = vmul.f32 %v476, %v476
      %v573 = vmul.f32 %v477, %v477
      %v574 = vmul.f32 %v478, %v478
      %v575 = vmul.f32 %v479, %v479
      %v576 = vmul.f32 %v480, %v480
      %v577 = vmul.f32 %v481, %v481
      %v578 = vmul.f32 %v482, %v482
      %v579 = vmul.f32 %v483, %v483
      %v580 = vmul.f32 %v484, %v484
      %v581 = vmul.f32 %v485, %v485
      %v582 = vmul.f32 %v486, %v486
      %v583 = vmul.f32 %v487, %v487
      %v584 = vmul.f32 %v488, %v488
      %v585 = vmul.f32 %v489, %v489
      %v586 = vmul.f32 %v490, %v490
      %v587 = vmul.f32 %v491, %v491
      %v588 = vmul.f32 %v492, %v492
      %v589 = vmul.f32 %v493, %v493
      %v590 = vmul.f32 %v494, %v494
      %v591 = vmul.f32 %v495, %v495
      %v592 = vmul.f32 %v496, %v496
      %v593 = vmul.f32 %v497, %v497
      %v594 = vmul.f32 %v498, %v498
      %v595 = vmul.f32 %v499, %v499
      %v596 = vmul.f32 %v500, %v500
      %v597 = vmul.f32 %v501, %v501
      %v598 = vmul.f32 %v502, %v502
      %v599 = vmul.f32 %v503, %v503
      %v600 = vmul.f32 %v504, %v504
      %v601 = vmul.f32 %v505, %v505
      %v602 = vmul.f32 %v506, %v506
      %v603 = vmul.f32 %v507, %v507
      %v604 = vmul.f32 %v508, %v508
      %v605 = vmul.f32 %v509, %v509
      %v606 = vmul.f32 %v510, %v510
      %v607 = vmul.f32 %v511, %v511
      %v608 = vmul.f32 %v512, %v512
      %v609 = vmul.f32 %v513, %v513
      %v610 = vmul.f32 %v514, %v514
      %v611 = vmul.f32 %v515, %v515
      %v612 = vmul.f32 %v516, %v516
      %v613 = vmul.f32 %v517, %v517
      %v614 = vmul.f32 %v518, %v518
      %v615 = vmul.f32 %v519, %v519
      %v616 = vmul.f32 %v520, %v520
      %v617 = vmul.f32 %v521, %v521
      %v618 = vmul.f32 %v522, %v522
      %v619 = vmul.f32 %v523, %v523
      %v620 = vmul.f32 %v524, %v524
      %v621 = vmul.f32 %v525, %v525
      %v622 = vmul.f32 %v526, %v526
      %v623 = vmul.f32 %v527, %v527
      %v624 = vmul.f32 %v528, %v528
      %v625 = vmul.f32 %v529, %v529
      %v626 = vmul.f32 %v530, %v530
      %v627 = vmul.f32 %v531, %v531
      %v628 = vmul.f32 %v532, %v532
      %v629 = vmul.f32 %v533, %v533
      %v630 = vmul.f32 %v534, %v534
      %v631 = vmul.f32 %v535, %v535
      %v632 = vmul.f32 %v536, %v536
      %v633 = vmul.f32 %v537, %v537
      %v634 = vmul.f32 %v538, %v538
      %v635 = vmul.f32 %v539, %v539
      %v636 = vmul.f32 %v540, %v540
      %v637 = vmul.f32 %v541, %v541
      %v638 = vmul.f32 %v542, %v542
      %v639 = vmul.f32 %v543, %v543
      %v640 = vmul.f32 %v544, %v544
      %v641 = vmul.f32 %v545, %v545
      %v642 = vmul.f32 %v546, %v546
      %v643 = vmul.f32 %v547, %v547
      %v644 = vmul.f32 %v548, %v548
      %v645 = vmul.f32 %v549, %v549
      %v646 = vmul.f32 %v550, %v550
      %v647 = vmul.f32 %v551, %v551
      %v648 = vmul.f32 %v552, %v552
      %v649 = vadd.f32 %v553, %v561
      %v650 = vadd.f32 %v649, %v569
      %v651 = vadd.f32 %v650, %v577
      %v652 = vadd.f32 %v651, %v585
      %v653 = vadd.f32 %v652, %v593
      %v654 = vadd.f32 %v653, %v601
      %v655 = vadd.f32 %v654, %v609
      %v656 = vadd.f32 %v655, %v617
      %v657 = vadd.f32 %v656, %v625
      %v658 = vadd.f32 %v657, %v633
      %v659 = vadd.f32 %v658, %v641
      %v660 = vrot.slane %v659, 4
      %v661 = vadd.f32 %v659, %v660
      %v662 = vrot.slane %v661, 2
      %v663 = vadd.f32 %v661, %v662
      %v664 = vrot.slane %v663, 1
      %v665 = vadd.f32 %v663, %v664
      %v666 = vadd.f32 %v554, %v562
      %v667 = vadd.f32 %v666, %v570
      %v668 = vadd.f32 %v667, %v578
      %v669 = vadd.f32 %v668, %v586
      %v670 = vadd.f32 %v669, %v594
      %v671 = vadd.f32 %v670, %v602
      %v672 = vadd.f32 %v671, %v610
      %v673 = vadd.f32 %v672, %v618
      %v674 = vadd.f32 %v673, %v626
      %v675 = vadd.f32 %v674, %v634
      %v676 = vadd.f32 %v675, %v642
      %v677 = vrot.slane %v676, 4
      %v678 = vadd.f32 %v676, %v677
      %v679 = vrot.slane %v678, 2
      %v680 = vadd.f32 %v678, %v679
      %v681 = vrot.slane %v680, 1
      %v682 = vadd.f32 %v680, %v681
      %v683 = vadd.f32 %v555, %v563
      %v684 = vadd.f32 %v683, %v571
      %v685 = vadd.f32 %v684, %v579
      %v686 = vadd.f32 %v685, %v587
      %v687 = vadd.f32 %v686, %v595
      %v688 = vadd.f32 %v687, %v603
      %v689 = vadd.f32 %v688, %v611
      %v690 = vadd.f32 %v689, %v619
      %v691 = vadd.f32 %v690, %v627
      %v692 = vadd.f32 %v691, %v635
      %v693 = vadd.f32 %v692, %v643
      %v694 = vrot.slane %v693, 4
      %v695 = vadd.f32 %v693, %v694
      %v696 = vrot.slane %v695, 2
      %v697 = vadd.f32 %v695, %v696
      %v698 = vrot.slane %v697, 1
      %v699 = vadd.f32 %v697, %v698
      %v700 = vadd.f32 %v556, %v564
      %v701 = vadd.f32 %v700, %v572
      %v702 = vadd.f32 %v701, %v580
      %v703 = vadd.f32 %v702, %v588
      %v704 = vadd.f32 %v703, %v596
      %v705 = vadd.f32 %v704, %v604
      %v706 = vadd.f32 %v705, %v612
      %v707 = vadd.f32 %v706, %v620
      %v708 = vadd.f32 %v707, %v628
      %v709 = vadd.f32 %v708, %v636
      %v710 = vadd.f32 %v709, %v644
      %v711 = vrot.slane %v710, 4
      %v712 = vadd.f32 %v710, %v711
      %v713 = vrot.slane %v712, 2
      %v714 = vadd.f32 %v712, %v713
      %v715 = vrot.slane %v714, 1
      %v716 = vadd.f32 %v714, %v715
      %v717 = vadd.f32 %v557, %v565
      %v718 = vadd.f32 %v717, %v573
      %v719 = vadd.f32 %v718, %v581
      %v720 = vadd.f32 %v719, %v589
      %v721 = vadd.f32 %v720, %v597
      %v722 = vadd.f32 %v721, %v605
      %v723 = vadd.f32 %v722, %v613
      %v724 = vadd.f32 %v723, %v621
      %v725 = vadd.f32 %v724, %v629
      %v726 = vadd.f32 %v725, %v637
      %v727 = vadd.f32 %v726, %v645
      %v728 = vrot.slane %v727, 4
      %v729 = vadd.f32 %v727, %v728
      %v730 = vrot.slane %v729, 2
      %v731 = vadd.f32 %v729, %v730
      %v732 = vrot.slane %v731, 1
      %v733 = vadd.f32 %v731, %v732
      %v734 = vadd.f32 %v558, %v566
      %v735 = vadd.f32 %v734, %v574
      %v736 = vadd.f32 %v735, %v582
      %v737 = vadd.f32 %v736, %v590
      %v738 = vadd.f32 %v737, %v598
      %v739 = vadd.f32 %v738, %v606
      %v740 = vadd.f32 %v739, %v614
      %v741 = vadd.f32 %v740, %v622
      %v742 = vadd.f32 %v741, %v630
      %v743 = vadd.f32 %v742, %v638
      %v744 = vadd.f32 %v743, %v646
      %v745 = vrot.slane %v744, 4
      %v746 = vadd.f32 %v744, %v745
      %v747 = vrot.slane %v746, 2
      %v748 = vadd.f32 %v746, %v747
      %v749 = vrot.slane %v748, 1
      %v750 = vadd.f32 %v748, %v749
      %v751 = vadd.f32 %v559, %v567
      %v752 = vadd.f32 %v751, %v575
      %v753 = vadd.f32 %v752, %v583
      %v754 = vadd.f32 %v753, %v591
      %v755 = vadd.f32 %v754, %v599
      %v756 = vadd.f32 %v755, %v607
      %v757 = vadd.f32 %v756, %v615
      %v758 = vadd.f32 %v757, %v623
      %v759 = vadd.f32 %v758, %v631
      %v760 = vadd.f32 %v759, %v639
      %v761 = vadd.f32 %v760, %v647
      %v762 = vrot.slane %v761, 4
      %v763 = vadd.f32 %v761, %v762
      %v764 = vrot.slane %v763, 2
      %v765 = vadd.f32 %v763, %v764
      %v766 = vrot.slane %v765, 1
      %v767 = vadd.f32 %v765, %v766
      %v768 = vadd.f32 %v560, %v568
      %v769 = vadd.f32 %v768, %v576
      %v770 = vadd.f32 %v769, %v584
      %v771 = vadd.f32 %v770, %v592
      %v772 = vadd.f32 %v771, %v600
      %v773 = vadd.f32 %v772, %v608
      %v774 = vadd.f32 %v773, %v616
      %v775 = vadd.f32 %v774, %v624
      %v776 = vadd.f32 %v775, %v632
      %v777 = vadd.f32 %v776, %v640
      %v778 = vadd.f32 %v777, %v648
      %v779 = vrot.slane %v778, 4
      %v780 = vadd.f32 %v778, %v779
      %v781 = vrot.slane %v780, 2
      %v782 = vadd.f32 %v780, %v781
      %v783 = vrot.slane %v782, 1
      %v784 = vadd.f32 %v782, %v783
      %v785 = vmul.f32 %v665, %v448
      %v786 = vmul.f32 %v682, %v448
      %v787 = vmul.f32 %v699, %v448
      %v788 = vmul.f32 %v716, %v448
      %v789 = vmul.f32 %v733, %v448
      %v790 = vmul.f32 %v750, %v448
      %v791 = vmul.f32 %v767, %v448
      %v792 = vmul.f32 %v784, %v448
      %v793 = vadd.f32 %v785, 1e-05
      %v794 = vadd.f32 %v786, 1e-05
      %v795 = vadd.f32 %v787, 1e-05
      %v796 = vadd.f32 %v788, 1e-05
      %v797 = vadd.f32 %v789, 1e-05
      %v798 = vadd.f32 %v790, 1e-05
      %v799 = vadd.f32 %v791, 1e-05
      %v800 = vadd.f32 %v792, 1e-05
      %v801 = vrsqrt.pop %v793
      %v802 = vmul.f32 %v801, %v793
      %v803 = vmul.f32 %v802, %v801
      %v804 = vmul.f32 0.5, %v803
      %v805 = vsub.f32 1.5, %v804
      %v806 = vmul.f32 %v801, %v805
      %vm807 = vweird.f32 %v793
      %vm808 = vweird.f32 %v801
      %vm809 = vmor %vm807, %vm808
      %v810 = vsel %vm809, %v801, %v806
      %v811 = vrsqrt.pop %v794
      %v812 = vmul.f32 %v811, %v794
      %v813 = vmul.f32 %v812, %v811
      %v814 = vmul.f32 0.5, %v813
      %v815 = vsub.f32 1.5, %v814
      %v816 = vmul.f32 %v811, %v815
      %vm817 = vweird.f32 %v794
      %vm818 = vweird.f32 %v811
      %vm819 = vmor %vm817, %vm818
      %v820 = vsel %vm819, %v811, %v816
      %v821 = vrsqrt.pop %v795
      %v822 = vmul.f32 %v821, %v795
      %v823 = vmul.f32 %v822, %v821
      %v824 = vmul.f32 0.5, %v823
      %v825 = vsub.f32 1.5, %v824
      %v826 = vmul.f32 %v821, %v825
      %vm827 = vweird.f32 %v795
      %vm828 = vweird.f32 %v821
      %vm829 = vmor %vm827, %vm828
      %v830 = vsel %vm829, %v821, %v826
      %v831 = vrsqrt.pop %v796
      %v832 = vmul.f32 %v831, %v796
      %v833 = vmul.f32 %v832, %v831
      %v834 = vmul.f32 0.5, %v833
      %v835 = vsub.f32 1.5, %v834
      %v836 = vmul.f32 %v831, %v835
      %vm837 = vweird.f32 %v796
      %vm838 = vweird.f32 %v831
      %vm839 = vmor %vm837, %vm838
      %v840 = vsel %vm839, %v831, %v836
      %v841 = vrsqrt.pop %v797
      %v842 = vmul.f32 %v841, %v797
      %v843 = vmul.f32 %v842, %v841
      %v844 = vmul.f32 0.5, %v843
      %v845 = vsub.f32 1.5, %v844
      %v846 = vmul.f32 %v841, %v845
      %vm847 = vweird.f32 %v797
      %vm848 = vweird.f32 %v841
      %vm849 = vmor %vm847, %vm848
      %v850 = vsel %vm849, %v841, %v846
      %v851 = vrsqrt.pop %v798
      %v852 = vmul.f32 %v851, %v798
      %v853 = vmul.f32 %v852, %v851
      %v854 = vmul.f32 0.5, %v853
      %v855 = vsub.f32 1.5, %v854
      %v856 = vmul.f32 %v851, %v855
      %vm857 = vweird.f32 %v798
      %vm858 = vweird.f32 %v851
      %vm859 = vmor %vm857, %vm858
      %v860 = vsel %vm859, %v851, %v856
      %v861 = vrsqrt.pop %v799
      %v862 = vmul.f32 %v861, %v799
      %v863 = vmul.f32 %v862, %v861
      %v864 = vmul.f32 0.5, %v863
      %v865 = vsub.f32 1.5, %v864
      %v866 = vmul.f32 %v861, %v865
      %vm867 = vweird.f32 %v799
      %vm868 = vweird.f32 %v861
      %vm869 = vmor %vm867, %vm868
      %v870 = vsel %vm869, %v861, %v866
      %v871 = vrsqrt.pop %v800
      %v872 = vmul.f32 %v871, %v800
      %v873 = vmul.f32 %v872, %v871
      %v874 = vmul.f32 0.5, %v873
      %v875 = vsub.f32 1.5, %v874
      %v876 = vmul.f32 %v871, %v875
      %vm877 = vweird.f32 %v800
      %vm878 = vweird.f32 %v871
      %vm879 = vmor %vm877, %vm878
      %v880 = vsel %vm879, %v871, %v876
      %v881 = vld [vmem:[%s1] sm:$0xff]
      %v882 = vld [vmem:[%s1 + $0x8] sm:$0xff]
      %v883 = vld [vmem:[%s1 + $0x10] sm:$0xff]
      %v884 = vld [vmem:[%s1 + $0x18] sm:$0xff]
      %v885 = vld [vmem:[%s1 + $0x20] sm:$0xff]
      %v886 = vld [vmem:[%s1 + $0x28] sm:$0xff]
      %v887 = vld [vmem:[%s1 + $0x30] sm:$0xff]
      %v888 = vld [vmem:[%s1 + $0x38] sm:$0xff]
      %v889 = vld [vmem:[%s1 + $0x40] sm:$0xff]
      %v890 = vld [vmem:[%s1 + $0x48] sm:$0xff]
      %v891 = vld [vmem:[%s1 + $0x50] sm:$0xff]
      %v892 = vld [vmem:[%s1 + $0x58] sm:$0xff]
      %v893 = vld [vmem:[%s2] sm:$0xff]
      %v894 = vld [vmem:[%s2 + $0x8] sm:$0xff]
      %v895 = vld [vmem:[%s2 + $0x10] sm:$0xff]
      %v896 = vld [vmem:[%s2 + $0x18] sm:$0xff]
      %v897 = vld [vmem:[%s2 + $0x20] sm:$0xff]
      %v898 = vld [vmem:[%s2 + $0x28] sm:$0xff]
      %v899 = vld [vmem:[%s2 + $0x30] sm:$0xff]
      %v900 = vld [vmem:[%s2 + $0x38] sm:$0xff]
      %v901 = vld [vmem:[%s2 + $0x40] sm:$0xff]
      %v902 = vld [vmem:[%s2 + $0x48] sm:$0xff]
      %v903 = vld [vmem:[%s2 + $0x50] sm:$0xff]
      %v904 = vld [vmem:[%s2 + $0x58] sm:$0xff]
      %v905 = vmul.f32 %v457, %v810
      %v906 = vmul.f32 %v458, %v820
      %v907 = vmul.f32 %v459, %v830
      %v908 = vmul.f32 %v460, %v840
      %v909 = vmul.f32 %v461, %v850
      %v910 = vmul.f32 %v462, %v860
      %v911 = vmul.f32 %v463, %v870
      %v912 = vmul.f32 %v464, %v880
      %v913 = vmul.f32 %v465, %v810
      %v914 = vmul.f32 %v466, %v820
      %v915 = vmul.f32 %v467, %v830
      %v916 = vmul.f32 %v468, %v840
      %v917 = vmul.f32 %v469, %v850
      %v918 = vmul.f32 %v470, %v860
      %v919 = vmul.f32 %v471, %v870
      %v920 = vmul.f32 %v472, %v880
      %v921 = vmul.f32 %v473, %v810
      %v922 = vmul.f32 %v474, %v820
      %v923 = vmul.f32 %v475, %v830
      %v924 = vmul.f32 %v476, %v840
      %v925 = vmul.f32 %v477, %v850
      %v926 = vmul.f32 %v478, %v860
      %v927 = vmul.f32 %v479, %v870
      %v928 = vmul.f32 %v480, %v880
      %v929 = vmul.f32 %v481, %v810
      %v930 = vmul.f32 %v482, %v820
      %v931 = vmul.f32 %v483, %v830
      %v932 = vmul.f32 %v484, %v840
      %v933 = vmul.f32 %v485, %v850
      %v934 = vmul.f32 %v486, %v860
      %v935 = vmul.f32 %v487, %v870
      %v936 = vmul.f32 %v488, %v880
      %v937 = vmul.f32 %v489, %v810
      %v938 = vmul.f32 %v490, %v820
      %v939 = vmul.f32 %v491, %v830
      %v940 = vmul.f32 %v492, %v840
      %v941 = vmul.f32 %v493, %v850
      %v942 = vmul.f32 %v494, %v860
      %v943 = vmul.f32 %v495, %v870
      %v944 = vmul.f32 %v496, %v880
      %v945 = vmul.f32 %v497, %v810
      %v946 = vmul.f32 %v498, %v820
      %v947 = vmul.f32 %v499, %v830
      %v948 = vmul.f32 %v500, %v840
      %v949 = vmul.f32 %v501, %v850
      %v950 = vmul.f32 %v502, %v860
      %v951 = vmul.f32 %v503, %v870
      %v952 = vmul.f32 %v504, %v880
      %v953 = vmul.f32 %v505, %v810
      %v954 = vmul.f32 %v506, %v820
      %v955 = vmul.f32 %v507, %v830
      %v956 = vmul.f32 %v508, %v840
      %v957 = vmul.f32 %v509, %v850
      %v958 = vmul.f32 %v510, %v860
      %v959 = vmul.f32 %v511, %v870
      %v960 = vmul.f32 %v512, %v880
      %v961 = vmul.f32 %v513, %v810
      %v962 = vmul.f32 %v514, %v820
      %v963 = vmul.f32 %v515, %v830
      %v964 = vmul.f32 %v516, %v840
      %v965 = vmul.f32 %v517, %v850
      %v966 = vmul.f32 %v518, %v860
      %v967 = vmul.f32 %v519, %v870
      %v968 = vmul.f32 %v520, %v880
      %v969 = vmul.f32 %v521, %v810
      %v970 = vmul.f32 %v522, %v820
      %v971 = vmul.f32 %v523, %v830
      %v972 = vmul.f32 %v524, %v840
      %v973 = vmul.f32 %v525, %v850
      %v974 = vmul.f32 %v526, %v860
      %v975 = vmul.f32 %v527, %v870
      %v976 = vmul.f32 %v528, %v880
      %v977 = vmul.f32 %v529, %v810
      %v978 = vmul.f32 %v530, %v820
      %v979 = vmul.f32 %v531, %v830
      %v980 = vmul.f32 %v532, %v840
      %v981 = vmul.f32 %v533, %v850
      %v982 = vmul.f32 %v534, %v860
      %v983 = vmul.f32 %v535, %v870
      %v984 = vmul.f32 %v536, %v880
      %v985 = vmul.f32 %v537, %v810
      %v986 = vmul.f32 %v538, %v820
      %v987 = vmul.f32 %v539, %v830
      %v988 = vmul.f32 %v540, %v840
      %v989 = vmul.f32 %v541, %v850
      %v990 = vmul.f32 %v542, %v860
      %v991 = vmul.f32 %v543, %v870
      %v992 = vmul.f32 %v544, %v880
      %v993 = vmul.f32 %v545, %v810
      %v994 = vmul.f32 %v546, %v820
      %v995 = vmul.f32 %v547, %v830
      %v996 = vmul.f32 %v548, %v840
      %v997 = vmul.f32 %v549, %v850
      %v998 = vmul.f32 %v550, %v860
      %v999 = vmul.f32 %v551, %v870
      %v1000 = vmul.f32 %v552, %v880
      %1002 = vset.pattern.permute.xlu0 0
      %1003 = vperm.xlu0 %1002, %v881
      %v1004 = vpop.permute.xlu0 %1003
      %1007 = vset.pattern.permute.xlu0 0
      %1008 = vperm.xlu0 %1007, %v882
      %v1009 = vpop.permute.xlu0 %1008
      %1012 = vset.pattern.permute.xlu0 0
      %1013 = vperm.xlu0 %1012, %v883
      %v1014 = vpop.permute.xlu0 %1013
      %1017 = vset.pattern.permute.xlu0 0
      %1018 = vperm.xlu0 %1017, %v884
      %v1019 = vpop.permute.xlu0 %1018
      %1022 = vset.pattern.permute.xlu0 0
      %1023 = vperm.xlu0 %1022, %v885
      %v1024 = vpop.permute.xlu0 %1023
      %1027 = vset.pattern.permute.xlu0 0
      %1028 = vperm.xlu0 %1027, %v886
      %v1029 = vpop.permute.xlu0 %1028
      %1032 = vset.pattern.permute.xlu0 0
      %1033 = vperm.xlu0 %1032, %v887
      %v1034 = vpop.permute.xlu0 %1033
      %1037 = vset.pattern.permute.xlu0 0
      %1038 = vperm.xlu0 %1037, %v888
      %v1039 = vpop.permute.xlu0 %1038
      %1042 = vset.pattern.permute.xlu0 0
      %1043 = vperm.xlu0 %1042, %v889
      %v1044 = vpop.permute.xlu0 %1043
      %1047 = vset.pattern.permute.xlu0 0
      %1048 = vperm.xlu0 %1047, %v890
      %v1049 = vpop.permute.xlu0 %1048
      %1052 = vset.pattern.permute.xlu0 0
      %1053 = vperm.xlu0 %1052, %v891
      %v1054 = vpop.permute.xlu0 %1053
      %1057 = vset.pattern.permute.xlu0 0
      %1058 = vperm.xlu0 %1057, %v892
      %v1059 = vpop.permute.xlu0 %1058
      %v1061 = vmul.f32 %v905, %v1004
      %v1062 = vmul.f32 %v906, %v1004
      %v1063 = vmul.f32 %v907, %v1004
      %v1064 = vmul.f32 %v908, %v1004
      %v1065 = vmul.f32 %v909, %v1004
      %v1066 = vmul.f32 %v910, %v1004
      %v1067 = vmul.f32 %v911, %v1004
      %v1068 = vmul.f32 %v912, %v1004
      %v1069 = vmul.f32 %v913, %v1009
      %v1070 = vmul.f32 %v914, %v1009
      %v1071 = vmul.f32 %v915, %v1009
      %v1072 = vmul.f32 %v916, %v1009
      %v1073 = vmul.f32 %v917, %v1009
      %v1074 = vmul.f32 %v918, %v1009
      %v1075 = vmul.f32 %v919, %v1009
      %v1076 = vmul.f32 %v920, %v1009
      %v1077 = vmul.f32 %v921, %v1014
      %v1078 = vmul.f32 %v922, %v1014
      %v1079 = vmul.f32 %v923, %v1014
      %v1080 = vmul.f32 %v924, %v1014
      %v1081 = vmul.f32 %v925, %v1014
      %v1082 = vmul.f32 %v926, %v1014
      %v1083 = vmul.f32 %v927, %v1014
      %v1084 = vmul.f32 %v928, %v1014
      %v1085 = vmul.f32 %v929, %v1019
      %v1086 = vmul.f32 %v930, %v1019
      %v1087 = vmul.f32 %v931, %v1019
      %v1088 = vmul.f32 %v932, %v1019
      %v1089 = vmul.f32 %v933, %v1019
      %v1090 = vmul.f32 %v934, %v1019
      %v1091 = vmul.f32 %v935, %v1019
      %v1092 = vmul.f32 %v936, %v1019
      %v1093 = vmul.f32 %v937, %v1024
      %v1094 = vmul.f32 %v938, %v1024
      %v1095 = vmul.f32 %v939, %v1024
      %v1096 = vmul.f32 %v940, %v1024
      %v1097 = vmul.f32 %v941, %v1024
      %v1098 = vmul.f32 %v942, %v1024
      %v1099 = vmul.f32 %v943, %v1024
      %v1100 = vmul.f32 %v944, %v1024
      %v1101 = vmul.f32 %v945, %v1029
      %v1102 = vmul.f32 %v946, %v1029
      %v1103 = vmul.f32 %v947, %v1029
      %v1104 = vmul.f32 %v948, %v1029
      %v1105 = vmul.f32 %v949, %v1029
      %v1106 = vmul.f32 %v950, %v1029
      %v1107 = vmul.f32 %v951, %v1029
      %v1108 = vmul.f32 %v952, %v1029
      %v1109 = vmul.f32 %v953, %v1034
      %v1110 = vmul.f32 %v954, %v1034
      %v1111 = vmul.f32 %v955, %v1034
      %v1112 = vmul.f32 %v956, %v1034
      %v1113 = vmul.f32 %v957, %v1034
      %v1114 = vmul.f32 %v958, %v1034
      %v1115 = vmul.f32 %v959, %v1034
      %v1116 = vmul.f32 %v960, %v1034
      %v1117 = vmul.f32 %v961, %v1039
      %v1118 = vmul.f32 %v962, %v1039
      %v1119 = vmul.f32 %v963, %v1039
      %v1120 = vmul.f32 %v964, %v1039
      %v1121 = vmul.f32 %v965, %v1039
      %v1122 = vmul.f32 %v966, %v1039
      %v1123 = vmul.f32 %v967, %v1039
      %v1124 = vmul.f32 %v968, %v1039
      %v1125 = vmul.f32 %v969, %v1044
      %v1126 = vmul.f32 %v970, %v1044
      %v1127 = vmul.f32 %v971, %v1044
      %v1128 = vmul.f32 %v972, %v1044
      %v1129 = vmul.f32 %v973, %v1044
      %v1130 = vmul.f32 %v974, %v1044
      %v1131 = vmul.f32 %v975, %v1044
      %v1132 = vmul.f32 %v976, %v1044
      %v1133 = vmul.f32 %v977, %v1049
      %v1134 = vmul.f32 %v978, %v1049
      %v1135 = vmul.f32 %v979, %v1049
      %v1136 = vmul.f32 %v980, %v1049
      %v1137 = vmul.f32 %v981, %v1049
      %v1138 = vmul.f32 %v982, %v1049
      %v1139 = vmul.f32 %v983, %v1049
      %v1140 = vmul.f32 %v984, %v1049
      %v1141 = vmul.f32 %v985, %v1054
      %v1142 = vmul.f32 %v986, %v1054
      %v1143 = vmul.f32 %v987, %v1054
      %v1144 = vmul.f32 %v988, %v1054
      %v1145 = vmul.f32 %v989, %v1054
      %v1146 = vmul.f32 %v990, %v1054
      %v1147 = vmul.f32 %v991, %v1054
      %v1148 = vmul.f32 %v992, %v1054
      %v1149 = vmul.f32 %v993, %v1059
      %v1150 = vmul.f32 %v994, %v1059
      %v1151 = vmul.f32 %v995, %v1059
      %v1152 = vmul.f32 %v996, %v1059
      %v1153 = vmul.f32 %v997, %v1059
      %v1154 = vmul.f32 %v998, %v1059
      %v1155 = vmul.f32 %v999, %v1059
      %v1156 = vmul.f32 %v1000, %v1059
      %1158 = vset.pattern.permute.xlu0 0
      %1159 = vperm.xlu0 %1158, %v893
      %v1160 = vpop.permute.xlu0 %1159
      %1163 = vset.pattern.permute.xlu0 0
      %1164 = vperm.xlu0 %1163, %v894
      %v1165 = vpop.permute.xlu0 %1164
      %1168 = vset.pattern.permute.xlu0 0
      %1169 = vperm.xlu0 %1168, %v895
      %v1170 = vpop.permute.xlu0 %1169
      %1173 = vset.pattern.permute.xlu0 0
      %1174 = vperm.xlu0 %1173, %v896
      %v1175 = vpop.permute.xlu0 %1174
      %1178 = vset.pattern.permute.xlu0 0
      %1179 = vperm.xlu0 %1178, %v897
      %v1180 = vpop.permute.xlu0 %1179
      %1183 = vset.pattern.permute.xlu0 0
      %1184 = vperm.xlu0 %1183, %v898
      %v1185 = vpop.permute.xlu0 %1184
      %1188 = vset.pattern.permute.xlu0 0
      %1189 = vperm.xlu0 %1188, %v899
      %v1190 = vpop.permute.xlu0 %1189
      %1193 = vset.pattern.permute.xlu0 0
      %1194 = vperm.xlu0 %1193, %v900
      %v1195 = vpop.permute.xlu0 %1194
      %1198 = vset.pattern.permute.xlu0 0
      %1199 = vperm.xlu0 %1198, %v901
      %v1200 = vpop.permute.xlu0 %1199
      %1203 = vset.pattern.permute.xlu0 0
      %1204 = vperm.xlu0 %1203, %v902
      %v1205 = vpop.permute.xlu0 %1204
      %1208 = vset.pattern.permute.xlu0 0
      %1209 = vperm.xlu0 %1208, %v903
      %v1210 = vpop.permute.xlu0 %1209
      %1213 = vset.pattern.permute.xlu0 0
      %1214 = vperm.xlu0 %1213, %v904
      %v1215 = vpop.permute.xlu0 %1214
      %v1217 = vadd.f32 %v1061, %v1160
      %v1218 = vadd.f32 %v1062, %v1160
      %v1219 = vadd.f32 %v1063, %v1160
      %v1220 = vadd.f32 %v1064, %v1160
      %v1221 = vadd.f32 %v1065, %v1160
      %v1222 = vadd.f32 %v1066, %v1160
      %v1223 = vadd.f32 %v1067, %v1160
      %v1224 = vadd.f32 %v1068, %v1160
      %v1225 = vadd.f32 %v1069, %v1165
      %v1226 = vadd.f32 %v1070, %v1165
      %v1227 = vadd.f32 %v1071, %v1165
      %v1228 = vadd.f32 %v1072, %v1165
      %v1229 = vadd.f32 %v1073, %v1165
      %v1230 = vadd.f32 %v1074, %v1165
      %v1231 = vadd.f32 %v1075, %v1165
      %v1232 = vadd.f32 %v1076, %v1165
      %v1233 = vadd.f32 %v1077, %v1170
      %v1234 = vadd.f32 %v1078, %v1170
      %v1235 = vadd.f32 %v1079, %v1170
      %v1236 = vadd.f32 %v1080, %v1170
      %v1237 = vadd.f32 %v1081, %v1170
      %v1238 = vadd.f32 %v1082, %v1170
      %v1239 = vadd.f32 %v1083, %v1170
      %v1240 = vadd.f32 %v1084, %v1170
      %v1241 = vadd.f32 %v1085, %v1175
      %v1242 = vadd.f32 %v1086, %v1175
      %v1243 = vadd.f32 %v1087, %v1175
      %v1244 = vadd.f32 %v1088, %v1175
      %v1245 = vadd.f32 %v1089, %v1175
      %v1246 = vadd.f32 %v1090, %v1175
      %v1247 = vadd.f32 %v1091, %v1175
      %v1248 = vadd.f32 %v1092, %v1175
      %v1249 = vadd.f32 %v1093, %v1180
      %v1250 = vadd.f32 %v1094, %v1180
      %v1251 = vadd.f32 %v1095, %v1180
      %v1252 = vadd.f32 %v1096, %v1180
      %v1253 = vadd.f32 %v1097, %v1180
      %v1254 = vadd.f32 %v1098, %v1180
      %v1255 = vadd.f32 %v1099, %v1180
      %v1256 = vadd.f32 %v1100, %v1180
      %v1257 = vadd.f32 %v1101, %v1185
      %v1258 = vadd.f32 %v1102, %v1185
      %v1259 = vadd.f32 %v1103, %v1185
      %v1260 = vadd.f32 %v1104, %v1185
      %v1261 = vadd.f32 %v1105, %v1185
      %v1262 = vadd.f32 %v1106, %v1185
      %v1263 = vadd.f32 %v1107, %v1185
      %v1264 = vadd.f32 %v1108, %v1185
      %v1265 = vadd.f32 %v1109, %v1190
      %v1266 = vadd.f32 %v1110, %v1190
      %v1267 = vadd.f32 %v1111, %v1190
      %v1268 = vadd.f32 %v1112, %v1190
      %v1269 = vadd.f32 %v1113, %v1190
      %v1270 = vadd.f32 %v1114, %v1190
      %v1271 = vadd.f32 %v1115, %v1190
      %v1272 = vadd.f32 %v1116, %v1190
      %v1273 = vadd.f32 %v1117, %v1195
      %v1274 = vadd.f32 %v1118, %v1195
      %v1275 = vadd.f32 %v1119, %v1195
      %v1276 = vadd.f32 %v1120, %v1195
      %v1277 = vadd.f32 %v1121, %v1195
      %v1278 = vadd.f32 %v1122, %v1195
      %v1279 = vadd.f32 %v1123, %v1195
      %v1280 = vadd.f32 %v1124, %v1195
      %v1281 = vadd.f32 %v1125, %v1200
      %v1282 = vadd.f32 %v1126, %v1200
      %v1283 = vadd.f32 %v1127, %v1200
      %v1284 = vadd.f32 %v1128, %v1200
      %v1285 = vadd.f32 %v1129, %v1200
      %v1286 = vadd.f32 %v1130, %v1200
      %v1287 = vadd.f32 %v1131, %v1200
      %v1288 = vadd.f32 %v1132, %v1200
      %v1289 = vadd.f32 %v1133, %v1205
      %v1290 = vadd.f32 %v1134, %v1205
      %v1291 = vadd.f32 %v1135, %v1205
      %v1292 = vadd.f32 %v1136, %v1205
      %v1293 = vadd.f32 %v1137, %v1205
      %v1294 = vadd.f32 %v1138, %v1205
      %v1295 = vadd.f32 %v1139, %v1205
      %v1296 = vadd.f32 %v1140, %v1205
      %v1297 = vadd.f32 %v1141, %v1210
      %v1298 = vadd.f32 %v1142, %v1210
      %v1299 = vadd.f32 %v1143, %v1210
      %v1300 = vadd.f32 %v1144, %v1210
      %v1301 = vadd.f32 %v1145, %v1210
      %v1302 = vadd.f32 %v1146, %v1210
      %v1303 = vadd.f32 %v1147, %v1210
      %v1304 = vadd.f32 %v1148, %v1210
      %v1305 = vadd.f32 %v1149, %v1215
      %v1306 = vadd.f32 %v1150, %v1215
      %v1307 = vadd.f32 %v1151, %v1215
      %v1308 = vadd.f32 %v1152, %v1215
      %v1309 = vadd.f32 %v1153, %v1215
      %v1310 = vadd.f32 %v1154, %v1215
      %v1311 = vadd.f32 %v1155, %v1215
      %v1312 = vadd.f32 %v1156, %v1215
      %1313 = vxpose.xlu0.b32.start [1/16] %v1217, 128
      %1314 = vxpose.xlu0.b32.cont [2/16] %v1225, 128
      %1315 = vxpose.xlu0.b32.cont [3/16] %v1233, 128
      %1316 = vxpose.xlu0.b32.cont [4/16] %v1241, 128
      %1317 = vxpose.xlu0.b32.cont [5/16] %v1249, 128
      %1318 = vxpose.xlu0.b32.cont [6/16] %v1257, 128
      %1319 = vxpose.xlu0.b32.cont [7/16] %v1265, 128
      %1320 = vxpose.xlu0.b32.cont [8/16] %v1273, 128
      %1321 = vxpose.xlu0.b32.cont [9/16] %v1281, 128
      %1322 = vxpose.xlu0.b32.cont [10/16] %v1289, 128
      %1323 = vxpose.xlu0.b32.cont [11/16] %v1297, 128
      %1324 = vxpose.xlu0.b32.cont [12/16] %v1305, 128
      %1325 = vxpose.xlu0.b32.cont [13/16] 0.0, 128
      %1326 = vxpose.xlu0.b32.cont [14/16] 0.0, 128
      %1327 = vxpose.xlu0.b32.cont [15/16] 0.0, 128
      %1328 = vxpose.xlu0.b32.end [16/16] 0.0, 128
      %v1329 = vpop.trf.xlu0
      %v1330 = vpop.trf.xlu0
      %v1331 = vpop.trf.xlu0
      %v1332 = vpop.trf.xlu0
      %v1333 = vpop.trf.xlu0
      %v1334 = vpop.trf.xlu0
      %v1335 = vpop.trf.xlu0
      %v1336 = vpop.trf.xlu0
      %v1337 = vpop.trf.xlu0
      %v1338 = vpop.trf.xlu0
      %v1339 = vpop.trf.xlu0
      %v1340 = vpop.trf.xlu0
      %v1341 = vpop.trf.xlu0
      %v1342 = vpop.trf.xlu0
      %v1343 = vpop.trf.xlu0
      %v1344 = vpop.trf.xlu0
      %1345 = vxpose.xlu0.b32.start [1/16] %v1218, 128
      %1346 = vxpose.xlu0.b32.cont [2/16] %v1226, 128
      %1347 = vxpose.xlu0.b32.cont [3/16] %v1234, 128
      %1348 = vxpose.xlu0.b32.cont [4/16] %v1242, 128
      %1349 = vxpose.xlu0.b32.cont [5/16] %v1250, 128
      %1350 = vxpose.xlu0.b32.cont [6/16] %v1258, 128
      %1351 = vxpose.xlu0.b32.cont [7/16] %v1266, 128
      %1352 = vxpose.xlu0.b32.cont [8/16] %v1274, 128
      %1353 = vxpose.xlu0.b32.cont [9/16] %v1282, 128
      %1354 = vxpose.xlu0.b32.cont [10/16] %v1290, 128
      %1355 = vxpose.xlu0.b32.cont [11/16] %v1298, 128
      %1356 = vxpose.xlu0.b32.cont [12/16] %v1306, 128
      %1357 = vxpose.xlu0.b32.cont [13/16] 0.0, 128
      %1358 = vxpose.xlu0.b32.cont [14/16] 0.0, 128
      %1359 = vxpose.xlu0.b32.cont [15/16] 0.0, 128
      %1360 = vxpose.xlu0.b32.end [16/16] 0.0, 128
      %v1361 = vpop.trf.xlu0
      %v1362 = vpop.trf.xlu0
      %v1363 = vpop.trf.xlu0
      %v1364 = vpop.trf.xlu0
      %v1365 = vpop.trf.xlu0
      %v1366 = vpop.trf.xlu0
      %v1367 = vpop.trf.xlu0
      %v1368 = vpop.trf.xlu0
      %v1369 = vpop.trf.xlu0
      %v1370 = vpop.trf.xlu0
      %v1371 = vpop.trf.xlu0
      %v1372 = vpop.trf.xlu0
      %v1373 = vpop.trf.xlu0
      %v1374 = vpop.trf.xlu0
      %v1375 = vpop.trf.xlu0
      %v1376 = vpop.trf.xlu0
      %1377 = vxpose.xlu0.b32.start [1/16] %v1219, 128
      %1378 = vxpose.xlu0.b32.cont [2/16] %v1227, 128
      %1379 = vxpose.xlu0.b32.cont [3/16] %v1235, 128
      %1380 = vxpose.xlu0.b32.cont [4/16] %v1243, 128
      %1381 = vxpose.xlu0.b32.cont [5/16] %v1251, 128
      %1382 = vxpose.xlu0.b32.cont [6/16] %v1259, 128
      %1383 = vxpose.xlu0.b32.cont [7/16] %v1267, 128
      %1384 = vxpose.xlu0.b32.cont [8/16] %v1275, 128
      %1385 = vxpose.xlu0.b32.cont [9/16] %v1283, 128
      %1386 = vxpose.xlu0.b32.cont [10/16] %v1291, 128
      %1387 = vxpose.xlu0.b32.cont [11/16] %v1299, 128
      %1388 = vxpose.xlu0.b32.cont [12/16] %v1307, 128
      %1389 = vxpose.xlu0.b32.cont [13/16] 0.0, 128
      %1390 = vxpose.xlu0.b32.cont [14/16] 0.0, 128
      %1391 = vxpose.xlu0.b32.cont [15/16] 0.0, 128
      %1392 = vxpose.xlu0.b32.end [16/16] 0.0, 128
      %v1393 = vpop.trf.xlu0
      %v1394 = vpop.trf.xlu0
      %v1395 = vpop.trf.xlu0
      %v1396 = vpop.trf.xlu0
      %v1397 = vpop.trf.xlu0
      %v1398 = vpop.trf.xlu0
      %v1399 = vpop.trf.xlu0
      %v1400 = vpop.trf.xlu0
      %v1401 = vpop.trf.xlu0
      %v1402 = vpop.trf.xlu0
      %v1403 = vpop.trf.xlu0
      %v1404 = vpop.trf.xlu0
      %v1405 = vpop.trf.xlu0
      %v1406 = vpop.trf.xlu0
      %v1407 = vpop.trf.xlu0
      %v1408 = vpop.trf.xlu0
      %1409 = vxpose.xlu0.b32.start [1/16] %v1220, 128
      %1410 = vxpose.xlu0.b32.cont [2/16] %v1228, 128
      %1411 = vxpose.xlu0.b32.cont [3/16] %v1236, 128
      %1412 = vxpose.xlu0.b32.cont [4/16] %v1244, 128
      %1413 = vxpose.xlu0.b32.cont [5/16] %v1252, 128
      %1414 = vxpose.xlu0.b32.cont [6/16] %v1260, 128
      %1415 = vxpose.xlu0.b32.cont [7/16] %v1268, 128
      %1416 = vxpose.xlu0.b32.cont [8/16] %v1276, 128
      %1417 = vxpose.xlu0.b32.cont [9/16] %v1284, 128
      %1418 = vxpose.xlu0.b32.cont [10/16] %v1292, 128
      %1419 = vxpose.xlu0.b32.cont [11/16] %v1300, 128
      %1420 = vxpose.xlu0.b32.cont [12/16] %v1308, 128
      %1421 = vxpose.xlu0.b32.cont [13/16] 0.0, 128
      %1422 = vxpose.xlu0.b32.cont [14/16] 0.0, 128
      %1423 = vxpose.xlu0.b32.cont [15/16] 0.0, 128
      %1424 = vxpose.xlu0.b32.end [16/16] 0.0, 128
      %v1425 = vpop.trf.xlu0
      %v1426 = vpop.trf.xlu0
      %v1427 = vpop.trf.xlu0
      %v1428 = vpop.trf.xlu0
      %v1429 = vpop.trf.xlu0
      %v1430 = vpop.trf.xlu0
      %v1431 = vpop.trf.xlu0
      %v1432 = vpop.trf.xlu0
      %v1433 = vpop.trf.xlu0
      %v1434 = vpop.trf.xlu0
      %v1435 = vpop.trf.xlu0
      %v1436 = vpop.trf.xlu0
      %v1437 = vpop.trf.xlu0
      %v1438 = vpop.trf.xlu0
      %v1439 = vpop.trf.xlu0
      %v1440 = vpop.trf.xlu0
      %1441 = vxpose.xlu0.b32.start [1/16] %v1221, 128
      %1442 = vxpose.xlu0.b32.cont [2/16] %v1229, 128
      %1443 = vxpose.xlu0.b32.cont [3/16] %v1237, 128
      %1444 = vxpose.xlu0.b32.cont [4/16] %v1245, 128
      %1445 = vxpose.xlu0.b32.cont [5/16] %v1253, 128
      %1446 = vxpose.xlu0.b32.cont [6/16] %v1261, 128
      %1447 = vxpose.xlu0.b32.cont [7/16] %v1269, 128
      %1448 = vxpose.xlu0.b32.cont [8/16] %v1277, 128
      %1449 = vxpose.xlu0.b32.cont [9/16] %v1285, 128
      %1450 = vxpose.xlu0.b32.cont [10/16] %v1293, 128
      %1451 = vxpose.xlu0.b32.cont [11/16] %v1301, 128
      %1452 = vxpose.xlu0.b32.cont [12/16] %v1309, 128
      %1453 = vxpose.xlu0.b32.cont [13/16] 0.0, 128
      %1454 = vxpose.xlu0.b32.cont [14/16] 0.0, 128
      %1455 = vxpose.xlu0.b32.cont [15/16] 0.0, 128
      %1456 = vxpose.xlu0.b32.end [16/16] 0.0, 128
      %v1457 = vpop.trf.xlu0
      %v1458 = vpop.trf.xlu0
      %v1459 = vpop.trf.xlu0
      %v1460 = vpop.trf.xlu0
      %v1461 = vpop.trf.xlu0
      %v1462 = vpop.trf.xlu0
      %v1463 = vpop.trf.xlu0
      %v1464 = vpop.trf.xlu0
      %v1465 = vpop.trf.xlu0
      %v1466 = vpop.trf.xlu0
      %v1467 = vpop.trf.xlu0
      %v1468 = vpop.trf.xlu0
      %v1469 = vpop.trf.xlu0
      %v1470 = vpop.trf.xlu0
      %v1471 = vpop.trf.xlu0
      %v1472 = vpop.trf.xlu0
      %1473 = vxpose.xlu0.b32.start [1/16] %v1222, 128
      %1474 = vxpose.xlu0.b32.cont [2/16] %v1230, 128
      %1475 = vxpose.xlu0.b32.cont [3/16] %v1238, 128
      %1476 = vxpose.xlu0.b32.cont [4/16] %v1246, 128
      %1477 = vxpose.xlu0.b32.cont [5/16] %v1254, 128
      %1478 = vxpose.xlu0.b32.cont [6/16] %v1262, 128
      %1479 = vxpose.xlu0.b32.cont [7/16] %v1270, 128
      %1480 = vxpose.xlu0.b32.cont [8/16] %v1278, 128
      %1481 = vxpose.xlu0.b32.cont [9/16] %v1286, 128
      %1482 = vxpose.xlu0.b32.cont [10/16] %v1294, 128
      %1483 = vxpose.xlu0.b32.cont [11/16] %v1302, 128
      %1484 = vxpose.xlu0.b32.cont [12/16] %v1310, 128
      %1485 = vxpose.xlu0.b32.cont [13/16] 0.0, 128
      %1486 = vxpose.xlu0.b32.cont [14/16] 0.0, 128
      %1487 = vxpose.xlu0.b32.cont [15/16] 0.0, 128
      %1488 = vxpose.xlu0.b32.end [16/16] 0.0, 128
      %v1489 = vpop.trf.xlu0
      %v1490 = vpop.trf.xlu0
      %v1491 = vpop.trf.xlu0
      %v1492 = vpop.trf.xlu0
      %v1493 = vpop.trf.xlu0
      %v1494 = vpop.trf.xlu0
      %v1495 = vpop.trf.xlu0
      %v1496 = vpop.trf.xlu0
      %v1497 = vpop.trf.xlu0
      %v1498 = vpop.trf.xlu0
      %v1499 = vpop.trf.xlu0
      %v1500 = vpop.trf.xlu0
      %v1501 = vpop.trf.xlu0
      %v1502 = vpop.trf.xlu0
      %v1503 = vpop.trf.xlu0
      %v1504 = vpop.trf.xlu0
      %1505 = vxpose.xlu0.b32.start [1/16] %v1223, 128
      %1506 = vxpose.xlu0.b32.cont [2/16] %v1231, 128
      %1507 = vxpose.xlu0.b32.cont [3/16] %v1239, 128
      %1508 = vxpose.xlu0.b32.cont [4/16] %v1247, 128
      %1509 = vxpose.xlu0.b32.cont [5/16] %v1255, 128
      %1510 = vxpose.xlu0.b32.cont [6/16] %v1263, 128
      %1511 = vxpose.xlu0.b32.cont [7/16] %v1271, 128
      %1512 = vxpose.xlu0.b32.cont [8/16] %v1279, 128
      %1513 = vxpose.xlu0.b32.cont [9/16] %v1287, 128
      %1514 = vxpose.xlu0.b32.cont [10/16] %v1295, 128
      %1515 = vxpose.xlu0.b32.cont [11/16] %v1303, 128
      %1516 = vxpose.xlu0.b32.cont [12/16] %v1311, 128
      %1517 = vxpose.xlu0.b32.cont [13/16] 0.0, 128
      %1518 = vxpose.xlu0.b32.cont [14/16] 0.0, 128
      %1519 = vxpose.xlu0.b32.cont [15/16] 0.0, 128
      %1520 = vxpose.xlu0.b32.end [16/16] 0.0, 128
      %v1521 = vpop.trf.xlu0
      %v1522 = vpop.trf.xlu0
      %v1523 = vpop.trf.xlu0
      %v1524 = vpop.trf.xlu0
      %v1525 = vpop.trf.xlu0
      %v1526 = vpop.trf.xlu0
      %v1527 = vpop.trf.xlu0
      %v1528 = vpop.trf.xlu0
      %v1529 = vpop.trf.xlu0
      %v1530 = vpop.trf.xlu0
      %v1531 = vpop.trf.xlu0
      %v1532 = vpop.trf.xlu0
      %v1533 = vpop.trf.xlu0
      %v1534 = vpop.trf.xlu0
      %v1535 = vpop.trf.xlu0
      %v1536 = vpop.trf.xlu0
      %1537 = vxpose.xlu0.b32.start [1/16] %v1224, 128
      %1538 = vxpose.xlu0.b32.cont [2/16] %v1232, 128
      %1539 = vxpose.xlu0.b32.cont [3/16] %v1240, 128
      %1540 = vxpose.xlu0.b32.cont [4/16] %v1248, 128
      %1541 = vxpose.xlu0.b32.cont [5/16] %v1256, 128
      %1542 = vxpose.xlu0.b32.cont [6/16] %v1264, 128
      %1543 = vxpose.xlu0.b32.cont [7/16] %v1272, 128
      %1544 = vxpose.xlu0.b32.cont [8/16] %v1280, 128
      %1545 = vxpose.xlu0.b32.cont [9/16] %v1288, 128
      %1546 = vxpose.xlu0.b32.cont [10/16] %v1296, 128
      %1547 = vxpose.xlu0.b32.cont [11/16] %v1304, 128
      %1548 = vxpose.xlu0.b32.cont [12/16] %v1312, 128
      %1549 = vxpose.xlu0.b32.cont [13/16] 0.0, 128
      %1550 = vxpose.xlu0.b32.cont [14/16] 0.0, 128
      %1551 = vxpose.xlu0.b32.cont [15/16] 0.0, 128
      %1552 = vxpose.xlu0.b32.end [16/16] 0.0, 128
      %v1553 = vpop.trf.xlu0
      %v1554 = vpop.trf.xlu0
      %v1555 = vpop.trf.xlu0
      %v1556 = vpop.trf.xlu0
      %v1557 = vpop.trf.xlu0
      %v1558 = vpop.trf.xlu0
      %v1559 = vpop.trf.xlu0
      %v1560 = vpop.trf.xlu0
      %v1561 = vpop.trf.xlu0
      %v1562 = vpop.trf.xlu0
      %v1563 = vpop.trf.xlu0
      %v1564 = vpop.trf.xlu0
      %v1565 = vpop.trf.xlu0
      %v1566 = vpop.trf.xlu0
      %v1567 = vpop.trf.xlu0
      %v1568 = vpop.trf.xlu0
      %vm1569 = vcmask 785408
      %1570 = vst.msk [vmem:[%s208] sm:$0xff] %vm1569, %v1329
      %1571 = vst.msk [vmem:[%s208 + $0x8] sm:$0xff] %vm1569, %v1330
      %1572 = vst.msk [vmem:[%s208 + $0x10] sm:$0xff] %vm1569, %v1331
      %1573 = vst.msk [vmem:[%s208 + $0x18] sm:$0xff] %vm1569, %v1332
      %1574 = vst.msk [vmem:[%s208 + $0x20] sm:$0xff] %vm1569, %v1333
      %1575 = vst.msk [vmem:[%s208 + $0x28] sm:$0xff] %vm1569, %v1334
      %1576 = vst.msk [vmem:[%s208 + $0x30] sm:$0xff] %vm1569, %v1335
      %1577 = vst.msk [vmem:[%s208 + $0x38] sm:$0xff] %vm1569, %v1336
      %1578 = vst.msk [vmem:[%s208 + $0x40] sm:$0xff] %vm1569, %v1337
      %1579 = vst.msk [vmem:[%s208 + $0x48] sm:$0xff] %vm1569, %v1338
      %1580 = vst.msk [vmem:[%s208 + $0x50] sm:$0xff] %vm1569, %v1339
      %1581 = vst.msk [vmem:[%s208 + $0x58] sm:$0xff] %vm1569, %v1340
      %1582 = vst.msk [vmem:[%s208 + $0x60] sm:$0xff] %vm1569, %v1341
      %1583 = vst.msk [vmem:[%s208 + $0x68] sm:$0xff] %vm1569, %v1342
      %1584 = vst.msk [vmem:[%s208 + $0x70] sm:$0xff] %vm1569, %v1343
      %1585 = vst.msk [vmem:[%s208 + $0x78] sm:$0xff] %vm1569, %v1344
      %1586 = vst.msk [vmem:[%s208 + $0x80] sm:$0xff] %vm1569, %v1361
      %1587 = vst.msk [vmem:[%s208 + $0x88] sm:$0xff] %vm1569, %v1362
      %1588 = vst.msk [vmem:[%s208 + $0x90] sm:$0xff] %vm1569, %v1363
      %1589 = vst.msk [vmem:[%s208 + $0x98] sm:$0xff] %vm1569, %v1364
      %1590 = vst.msk [vmem:[%s208 + $0xa0] sm:$0xff] %vm1569, %v1365
      %1591 = vst.msk [vmem:[%s208 + $0xa8] sm:$0xff] %vm1569, %v1366
      %1592 = vst.msk [vmem:[%s208 + $0xb0] sm:$0xff] %vm1569, %v1367
      %1593 = vst.msk [vmem:[%s208 + $0xb8] sm:$0xff] %vm1569, %v1368
      %1594 = vst.msk [vmem:[%s208 + $0xc0] sm:$0xff] %vm1569, %v1369
      %1595 = vst.msk [vmem:[%s208 + $0xc8] sm:$0xff] %vm1569, %v1370
      %1596 = vst.msk [vmem:[%s208 + $0xd0] sm:$0xff] %vm1569, %v1371
      %1597 = vst.msk [vmem:[%s208 + $0xd8] sm:$0xff] %vm1569, %v1372
      %1598 = vst.msk [vmem:[%s208 + $0xe0] sm:$0xff] %vm1569, %v1373
      %1599 = vst.msk [vmem:[%s208 + $0xe8] sm:$0xff] %vm1569, %v1374
      %1600 = vst.msk [vmem:[%s208 + $0xf0] sm:$0xff] %vm1569, %v1375
      %1601 = vst.msk [vmem:[%s208 + $0xf8] sm:$0xff] %vm1569, %v1376
      %1602 = vst.msk [vmem:[%s208 + $0x100] sm:$0xff] %vm1569, %v1393
      %1603 = vst.msk [vmem:[%s208 + $0x108] sm:$0xff] %vm1569, %v1394
      %1604 = vst.msk [vmem:[%s208 + $0x110] sm:$0xff] %vm1569, %v1395
      %1605 = vst.msk [vmem:[%s208 + $0x118] sm:$0xff] %vm1569, %v1396
      %1606 = vst.msk [vmem:[%s208 + $0x120] sm:$0xff] %vm1569, %v1397
      %1607 = vst.msk [vmem:[%s208 + $0x128] sm:$0xff] %vm1569, %v1398
      %1608 = vst.msk [vmem:[%s208 + $0x130] sm:$0xff] %vm1569, %v1399
      %1609 = vst.msk [vmem:[%s208 + $0x138] sm:$0xff] %vm1569, %v1400
      %1610 = vst.msk [vmem:[%s208 + $0x140] sm:$0xff] %vm1569, %v1401
      %1611 = vst.msk [vmem:[%s208 + $0x148] sm:$0xff] %vm1569, %v1402
      %1612 = vst.msk [vmem:[%s208 + $0x150] sm:$0xff] %vm1569, %v1403
      %1613 = vst.msk [vmem:[%s208 + $0x158] sm:$0xff] %vm1569, %v1404
      %1614 = vst.msk [vmem:[%s208 + $0x160] sm:$0xff] %vm1569, %v1405
      %1615 = vst.msk [vmem:[%s208 + $0x168] sm:$0xff] %vm1569, %v1406
      %1616 = vst.msk [vmem:[%s208 + $0x170] sm:$0xff] %vm1569, %v1407
      %1617 = vst.msk [vmem:[%s208 + $0x178] sm:$0xff] %vm1569, %v1408
      %1618 = vst.msk [vmem:[%s208 + $0x180] sm:$0xff] %vm1569, %v1425
      %1619 = vst.msk [vmem:[%s208 + $0x188] sm:$0xff] %vm1569, %v1426
      %1620 = vst.msk [vmem:[%s208 + $0x190] sm:$0xff] %vm1569, %v1427
      %1621 = vst.msk [vmem:[%s208 + $0x198] sm:$0xff] %vm1569, %v1428
      %1622 = vst.msk [vmem:[%s208 + $0x1a0] sm:$0xff] %vm1569, %v1429
      %1623 = vst.msk [vmem:[%s208 + $0x1a8] sm:$0xff] %vm1569, %v1430
      %1624 = vst.msk [vmem:[%s208 + $0x1b0] sm:$0xff] %vm1569, %v1431
      %1625 = vst.msk [vmem:[%s208 + $0x1b8] sm:$0xff] %vm1569, %v1432
      %1626 = vst.msk [vmem:[%s208 + $0x1c0] sm:$0xff] %vm1569, %v1433
      %1627 = vst.msk [vmem:[%s208 + $0x1c8] sm:$0xff] %vm1569, %v1434
      %1628 = vst.msk [vmem:[%s208 + $0x1d0] sm:$0xff] %vm1569, %v1435
      %1629 = vst.msk [vmem:[%s208 + $0x1d8] sm:$0xff] %vm1569, %v1436
      %1630 = vst.msk [vmem:[%s208 + $0x1e0] sm:$0xff] %vm1569, %v1437
      %1631 = vst.msk [vmem:[%s208 + $0x1e8] sm:$0xff] %vm1569, %v1438
      %1632 = vst.msk [vmem:[%s208 + $0x1f0] sm:$0xff] %vm1569, %v1439
      %1633 = vst.msk [vmem:[%s208 + $0x1f8] sm:$0xff] %vm1569, %v1440
      %1634 = vst.msk [vmem:[%s208 + $0x200] sm:$0xff] %vm1569, %v1457
      %1635 = vst.msk [vmem:[%s208 + $0x208] sm:$0xff] %vm1569, %v1458
      %1636 = vst.msk [vmem:[%s208 + $0x210] sm:$0xff] %vm1569, %v1459
      %1637 = vst.msk [vmem:[%s208 + $0x218] sm:$0xff] %vm1569, %v1460
      %1638 = vst.msk [vmem:[%s208 + $0x220] sm:$0xff] %vm1569, %v1461
      %1639 = vst.msk [vmem:[%s208 + $0x228] sm:$0xff] %vm1569, %v1462
      %1640 = vst.msk [vmem:[%s208 + $0x230] sm:$0xff] %vm1569, %v1463
      %1641 = vst.msk [vmem:[%s208 + $0x238] sm:$0xff] %vm1569, %v1464
      %1642 = vst.msk [vmem:[%s208 + $0x240] sm:$0xff] %vm1569, %v1465
      %1643 = vst.msk [vmem:[%s208 + $0x248] sm:$0xff] %vm1569, %v1466
      %1644 = vst.msk [vmem:[%s208 + $0x250] sm:$0xff] %vm1569, %v1467
      %1645 = vst.msk [vmem:[%s208 + $0x258] sm:$0xff] %vm1569, %v1468
      %1646 = vst.msk [vmem:[%s208 + $0x260] sm:$0xff] %vm1569, %v1469
      %1647 = vst.msk [vmem:[%s208 + $0x268] sm:$0xff] %vm1569, %v1470
      %1648 = vst.msk [vmem:[%s208 + $0x270] sm:$0xff] %vm1569, %v1471
      %1649 = vst.msk [vmem:[%s208 + $0x278] sm:$0xff] %vm1569, %v1472
      %1650 = vst.msk [vmem:[%s208 + $0x280] sm:$0xff] %vm1569, %v1489
      %1651 = vst.msk [vmem:[%s208 + $0x288] sm:$0xff] %vm1569, %v1490
      %1652 = vst.msk [vmem:[%s208 + $0x290] sm:$0xff] %vm1569, %v1491
      %1653 = vst.msk [vmem:[%s208 + $0x298] sm:$0xff] %vm1569, %v1492
      %1654 = vst.msk [vmem:[%s208 + $0x2a0] sm:$0xff] %vm1569, %v1493
      %1655 = vst.msk [vmem:[%s208 + $0x2a8] sm:$0xff] %vm1569, %v1494
      %1656 = vst.msk [vmem:[%s208 + $0x2b0] sm:$0xff] %vm1569, %v1495
      %1657 = vst.msk [vmem:[%s208 + $0x2b8] sm:$0xff] %vm1569, %v1496
      %1658 = vst.msk [vmem:[%s208 + $0x2c0] sm:$0xff] %vm1569, %v1497
      %1659 = vst.msk [vmem:[%s208 + $0x2c8] sm:$0xff] %vm1569, %v1498
      %1660 = vst.msk [vmem:[%s208 + $0x2d0] sm:$0xff] %vm1569, %v1499
      %1661 = vst.msk [vmem:[%s208 + $0x2d8] sm:$0xff] %vm1569, %v1500
      %1662 = vst.msk [vmem:[%s208 + $0x2e0] sm:$0xff] %vm1569, %v1501
      %1663 = vst.msk [vmem:[%s208 + $0x2e8] sm:$0xff] %vm1569, %v1502
      %1664 = vst.msk [vmem:[%s208 + $0x2f0] sm:$0xff] %vm1569, %v1503
      %1665 = vst.msk [vmem:[%s208 + $0x2f8] sm:$0xff] %vm1569, %v1504
      %1666 = vst.msk [vmem:[%s208 + $0x300] sm:$0xff] %vm1569, %v1521
      %1667 = vst.msk [vmem:[%s208 + $0x308] sm:$0xff] %vm1569, %v1522
      %1668 = vst.msk [vmem:[%s208 + $0x310] sm:$0xff] %vm1569, %v1523
      %1669 = vst.msk [vmem:[%s208 + $0x318] sm:$0xff] %vm1569, %v1524
      %1670 = vst.msk [vmem:[%s208 + $0x320] sm:$0xff] %vm1569, %v1525
      %1671 = vst.msk [vmem:[%s208 + $0x328] sm:$0xff] %vm1569, %v1526
      %1672 = vst.msk [vmem:[%s208 + $0x330] sm:$0xff] %vm1569, %v1527
      %1673 = vst.msk [vmem:[%s208 + $0x338] sm:$0xff] %vm1569, %v1528
      %1674 = vst.msk [vmem:[%s208 + $0x340] sm:$0xff] %vm1569, %v1529
      %1675 = vst.msk [vmem:[%s208 + $0x348] sm:$0xff] %vm1569, %v1530
      %1676 = vst.msk [vmem:[%s208 + $0x350] sm:$0xff] %vm1569, %v1531
      %1677 = vst.msk [vmem:[%s208 + $0x358] sm:$0xff] %vm1569, %v1532
      %1678 = vst.msk [vmem:[%s208 + $0x360] sm:$0xff] %vm1569, %v1533
      %1679 = vst.msk [vmem:[%s208 + $0x368] sm:$0xff] %vm1569, %v1534
      %1680 = vst.msk [vmem:[%s208 + $0x370] sm:$0xff] %vm1569, %v1535
      %1681 = vst.msk [vmem:[%s208 + $0x378] sm:$0xff] %vm1569, %v1536
      %1682 = vst.msk [vmem:[%s208 + $0x380] sm:$0xff] %vm1569, %v1553
      %1683 = vst.msk [vmem:[%s208 + $0x388] sm:$0xff] %vm1569, %v1554
      %1684 = vst.msk [vmem:[%s208 + $0x390] sm:$0xff] %vm1569, %v1555
      %1685 = vst.msk [vmem:[%s208 + $0x398] sm:$0xff] %vm1569, %v1556
      %1686 = vst.msk [vmem:[%s208 + $0x3a0] sm:$0xff] %vm1569, %v1557
      %1687 = vst.msk [vmem:[%s208 + $0x3a8] sm:$0xff] %vm1569, %v1558
      %1688 = vst.msk [vmem:[%s208 + $0x3b0] sm:$0xff] %vm1569, %v1559
      %1689 = vst.msk [vmem:[%s208 + $0x3b8] sm:$0xff] %vm1569, %v1560
      %1690 = vst.msk [vmem:[%s208 + $0x3c0] sm:$0xff] %vm1569, %v1561
      %1691 = vst.msk [vmem:[%s208 + $0x3c8] sm:$0xff] %vm1569, %v1562
      %1692 = vst.msk [vmem:[%s208 + $0x3d0] sm:$0xff] %vm1569, %v1563
      %1693 = vst.msk [vmem:[%s208 + $0x3d8] sm:$0xff] %vm1569, %v1564
      %1694 = vst.msk [vmem:[%s208 + $0x3e0] sm:$0xff] %vm1569, %v1565
      %1695 = vst.msk [vmem:[%s208 + $0x3e8] sm:$0xff] %vm1569, %v1566
      %1696 = vst.msk [vmem:[%s208 + $0x3f0] sm:$0xff] %vm1569, %v1567
      %1697 = vst.msk [vmem:[%s208 + $0x3f8] sm:$0xff] %vm1569, %v1568
      %s1698 = smul.u32 128, %s19
      %p1699 = scmp.lt.s32.totalorder %s18, 1
      %s1700 = scalar_select %p1699, %s18, 1
      %p1701 = scmp.lt.s32.totalorder %s1698, 127
      %s1702 = scalar_select %p1701, %s1698, 127
      %s1703 = smul.addr %s1700, 128
      %s1704 = sadd.s32 %s1702, %s1703
      %s1705 = smul.addr %s1704, 8
      %s1706 = scalar_lea.vmem %s3, %s1705
      // Predicated region
      $region33: #{patch_embed_forward.1} parent=31 // pred_check
        %p1707 = pneg %p116
      $region34: #{patch_embed_forward.1} parent=31 // pred_check_branch
        %1709 = sbr.rel (%p1707) target = $region36
      $region35: #{patch_embed_forward.1} parent=31 // pred_region
        %s1710 = smul.u32 128, %s19
      $region36: #{patch_embed_forward.1} parent=31 // pred_fallthru
        _
    $region32: #{patch_embed_forward.1} parent=5 // pred_fallthru
      _
    %p1711 = scmp.le.s32.totalorder 2, %s9
    // Predicated region
    $region37: #{patch_embed_forward.1} parent=5 // pred_check
      %p1712 = pneg %p1711
    $region38: #{patch_embed_forward.1} parent=5 // pred_check_branch
      %1714 = sbr.rel (%p1712) target = $region40
    $region39: #{patch_embed_forward.1} parent=5 // pred_region
      %s1715 = ssub.s32 %s9, 2
      // Predicated region
      $region41: #{patch_embed_forward.1} parent=39 // pred_check
        %p1716 = pneg %p122
      $region42: #{patch_embed_forward.1} parent=39 // pred_check_branch
        %1718 = sbr.rel (%p1716) target = $region44
      $region43: #{patch_embed_forward.1} parent=39 // pred_region
        %s1719 = smul.u32 128, %s21
        %p1720 = scmp.lt.s32.totalorder %s20, 1
        %s1721 = scalar_select %p1720, %s20, 1
        %p1722 = scmp.lt.s32.totalorder %s1719, 127
        %s1723 = scalar_select %p1722, %s1719, 127
        %s1724 = smul.addr %s1721, 128
        %s1725 = sadd.s32 %s1723, %s1724
        %s1726 = smul.addr %s1725, 8
        %s1727 = scalar_lea.vmem %s3, %s1726
      $region44: #{patch_embed_forward.1} parent=39 // pred_fallthru
        _
    $region40: #{patch_embed_forward.1} parent=5 // pred_fallthru
      _
  $region6: #{patch_embed_forward.1} parent=0 // loop_footer
    %s13 = sadd.s32 1, %s9
  $region7: #{patch_embed_forward.1} parent=0 // loop_footer_branch
    %8 = sbr.rel target = $region3
  $region8: #{patch_embed_forward.1} parent=0 // loop_exit
    _

</llo_original>
